<compile_context>
chip_gen: v5e
topology: v5e:2x2
jax: 0.10.0
libtpu: 0.0.40
codegen_flags: <defaults>
</compile_context>

<pallas_src>
import jax
import jax.numpy as jnp
from jax.experimental import pallas as pl
from jax.experimental.pallas import tpu as pltpu


# ----------------------------- kernel body ----------------------------------
def sublayer_connection_kernel(x_ref, w_ref, b_ref, o_ref, xn_ref):
    # LayerNorm statistics in f32 (torch eps=1e-5, biased variance), computed
    # once per row tile (column grid index j == 0) and cached as bf16 in VMEM.
    @pl.when(pl.program_id(1) == 0)
    def _():
        x = x_ref[...].astype(jnp.float32)                       # (TR, D)
        mean = jnp.mean(x, axis=-1, keepdims=True)
        ex2 = jnp.mean(x * x, axis=-1, keepdims=True)
        var = jnp.maximum(ex2 - mean * mean, 0.0)                # single pass, biased
        xn_ref[...] = ((x - mean) * jax.lax.rsqrt(var + 1e-5)).astype(jnp.bfloat16)

    # sublayer Linear on the MXU: bf16 operands, f32 accumulation.
    # gamma/beta/Linear-bias and the "x + x" doubling are folded into w/b.
    z = jnp.dot(xn_ref[...], w_ref[...], preferred_element_type=jnp.float32)  # (TR, TC)
    # dropout == identity (eval mode)
    o_ref[...] = (z + b_ref[...]).astype(o_ref.dtype)


# ----------------------------- wrapper ---------------------------------------
def _vmem_budgets():
    """Generation-aware (scoped_vmem_limit, resident_weight_budget) in bytes."""
    try:
        cap = int(pltpu.get_tpu_info().vmem_capacity_bytes)
    except Exception:
        cap = 64 << 20  # assume the tightest (v7x-like) budget if unknown
    if cap <= (64 << 20):                 # v7x: 64 MiB VMEM per TensorCore
        return 40 << 20, 12 << 20
    return 64 << 20, 32 << 20             # v5e / v6e: 128 MiB VMEM


def sublayer_connection(x, gamma, beta, w, b, *, tile_rows=None, tile_cols=None,
                        out_dtype=None):
    """x: [B, S, D]. gamma/beta: LayerNorm affine. w/b: sublayer Linear. -> [B, S, D]."""
    B, S, D = x.shape
    R = B * S
    out_dtype = jnp.dtype(out_dtype if out_dtype is not None else x.dtype)
    vmem_limit, weight_budget = _vmem_budgets()

    # ---- fold gamma, beta, bias and the final 2x into (w', b') once ----
    g = gamma.reshape(D).astype(jnp.float32)
    be = beta.reshape(D).astype(jnp.float32)
    wf = w.astype(jnp.float32)
    bf = b.reshape(D).astype(jnp.float32)
    w_fold = (2.0 * g[:, None] * wf).astype(jnp.bfloat16)        # (D, D) bf16 for the MXU
    b_fold = (2.0 * (be @ wf + bf)).reshape(1, D)                # (1, D) f32

    # ---- column (output-N) tiling: full weight resident unless over budget ----
    if tile_cols is None:
        if D * D * 2 <= weight_budget:
            tile_cols = D
        else:
            tile_cols = 512 if D % 512 == 0 else (256 if D % 256 == 0 else 128)
    tile_cols = min(int(tile_cols), D)
    assert D % tile_cols == 0, "d_model must be divisible by tile_cols"
    assert tile_cols == D or tile_cols % 128 == 0, "N tile must be lane-dense"
    n_col = D // tile_cols

    x_bytes = jnp.dtype(x.dtype).itemsize
    o_bytes = out_dtype.itemsize
    w_bufs = 1 if n_col == 1 else 2          # constant-index weight -> single buffered

    # ---- row tiling: largest pipeline/MXU-friendly tile that fits the budget ----
    r8 = ((R + 7) // 8) * 8
    if tile_rows is None:
        per_row = 2 * D * x_bytes + 2 * tile_cols * o_bytes + 2 * D   # x(2x)+out(2x)+xn scratch
        budget = vmem_limit - w_bufs * D * tile_cols * 2 - (4 << 20)  # compiler headroom
        tr = max(8, min(1024, budget // per_row))
        tr = min(tr, r8)
        if R >= 1024:
            # keep >= 2 row tiles so the "parallel" row axis can feed both v7x TCs
            tr = min(tr, max(512, ((pl.cdiv(R, 2) + 7) // 8) * 8))
        tile_rows = tr
    tile_rows = max(8, min((int(tile_rows) // 8) * 8, r8))
    n_row = pl.cdiv(R, tile_rows)            # last block may be partial; Pallas masks it

    # ---- block specs ----
    x_spec = pl.BlockSpec((tile_rows, D), lambda i, j: (i, 0))   # full D for LN stats
    if n_col == 1:  # constant index -> fetched once; single buffer halves VMEM use
        w_spec = pl.BlockSpec((D, tile_cols), lambda i, j: (0, j),
                              pipeline_mode=pl.Buffered(1))
    else:
        w_spec = pl.BlockSpec((D, tile_cols), lambda i, j: (0, j))
    b_spec = pl.BlockSpec((1, tile_cols), lambda i, j: (0, j),
                          pipeline_mode=pl.Buffered(1))          # tiny, never double-buffer
    o_spec = pl.BlockSpec((tile_rows, tile_cols), lambda i, j: (i, j))

    w_streams = 1 if n_col == 1 else n_row
    cost = pl.CostEstimate(
        flops=2 * R * D * D + 6 * R * D,
        transcendentals=R,                                        # one rsqrt per row
        bytes_accessed=int(R * D * x_bytes + w_streams * D * D * 2 + D * 4
                           + R * D * o_bytes),
    )

    x2 = x.reshape(R, D)
    out = pl.pallas_call(
        sublayer_connection_kernel,
        out_shape=jax.ShapeDtypeStruct((R, D), out_dtype),
        grid_spec=pltpu.PrefetchScalarGridSpec(
            num_scalar_prefetch=0,
            grid=(n_row, n_col),
            in_specs=[x_spec, w_spec, b_spec],
            out_specs=o_spec,
            scratch_shapes=[pltpu.VMEM((tile_rows, D), jnp.bfloat16)],  # cached xn
        ),
        compiler_params=pltpu.CompilerParams(
            # column axis carries the xn scratch across j -> must be "arbitrary"
            dimension_semantics=("parallel", "arbitrary"),
            vmem_limit_bytes=vmem_limit,
        ),
        cost_estimate=cost,
    )(x2, w_fold, b_fold)

    return out.reshape(B, S, D)


# ----------------------------- references ------------------------------------
def reference_f32(x, gamma, beta, w, b):
    """Literal module semantics (eval mode) in full f32: 2 * (LN(x) @ w + b)."""
    xf = x.astype(jnp.float32)
    mean = jnp.mean(xf, axis=-1, keepdims=True)
    var = jnp.mean((xf - mean) ** 2, axis=-1, keepdims=True)
    y = (xf - mean) * jax.lax.rsqrt(var + 1e-5) * gamma + beta
    z = y @ w + b
    return z + z


def reference_mxu(x, gamma, beta, w, b, out_dtype):
    """Mirrors the kernel's folded-param / bf16-MXU numerics for a tight check."""
    xf = x.astype(jnp.float32)
    mean = jnp.mean(xf, axis=-1, keepdims=True)
    ex2 = jnp.mean(xf * xf, axis=-1, keepdims=True)
    var = jnp.maximum(ex2 - mean * mean, 0.0)
    xn = ((xf - mean) * jax.lax.rsqrt(var + 1e-5)).astype(jnp.bfloat16)
    w_fold = (2.0 * gamma.reshape(-1, 1) * w).astype(jnp.bfloat16)
    b_fold = 2.0 * (beta @ w + b)
    z = jnp.dot(xn, w_fold, preferred_element_type=jnp.float32) + b_fold
    return z.astype(out_dtype)


# ----------------------------- demo / checks ---------------------------------
if __name__ == "__main__":
    key = jax.random.PRNGKey(0)
    kx, kg, kbe, kw, kb = jax.random.split(key, 5)

    B, S, D = 2, 512, 128
    x = jax.random.normal(kx, (B, S, D), dtype=jnp.float32)
    gamma = 1.0 + 0.1 * jax.random.normal(kg, (D,), dtype=jnp.float32)
    beta = 0.1 * jax.random.normal(kbe, (D,), dtype=jnp.float32)
    w = jax.random.normal(kw, (D, D), dtype=jnp.float32) * 0.05    # deterministic sublayer
    b = jax.random.normal(kb, (D,), dtype=jnp.float32) * 0.05

    # 1) main f32 path, auto-derived tiling (2 row tiles of 512)
    out = jax.block_until_ready(sublayer_connection(x, gamma, beta, w, b))
    assert out.shape == (B, S, D)
    ref_mx = reference_mxu(x, gamma, beta, w, b, jnp.float32)
    ref_hi = reference_f32(x, gamma, beta, w, b)
    assert bool(jnp.all(jnp.isfinite(out)))
    assert jnp.allclose(out, ref_mx, atol=1e-2, rtol=1e-2), "mismatch vs bf16-MXU reference"
    assert jnp.allclose(out, ref_hi, atol=5e-2, rtol=5e-2), "mismatch vs f32 reference"

    # 2) ragged rows (R=400, tile_rows=256) exercises the masked partial block path
    Sr = 200
    xr = jax.random.normal(kx, (B, Sr, D), dtype=jnp.float32)
    out_r = jax.block_until_ready(sublayer_connection(xr, gamma, beta, w, b, tile_rows=256))
    assert out_r.shape == (B, Sr, D)
    assert bool(jnp.all(jnp.isfinite(out_r)))
    assert jnp.allclose(out_r, reference_mxu(xr, gamma, beta, w, b, jnp.float32),
                        atol=1e-2, rtol=1e-2), "mismatch on ragged rows"

    # 3) bf16 in / bf16 out (halves HBM traffic on the mem-bound path)
    x_bf = x.astype(jnp.bfloat16)
    out_bf = jax.block_until_ready(sublayer_connection(x_bf, gamma, beta, w, b))
    assert out_bf.dtype == jnp.bfloat16 and out_bf.shape == (B, S, D)
    ref_bf = reference_mxu(x_bf, gamma, beta, w, b, jnp.bfloat16)
    assert jnp.allclose(out_bf.astype(jnp.float32), ref_bf.astype(jnp.float32),
                        atol=3e-2, rtol=3e-2), "mismatch on bf16 I/O path"

    print("KERNEL_OK")
</pallas_src>

<mosaic_0001>
module attributes {stable_mosaic.version = 11 : i64} {
  func.func @sublayer_connection_kernel(%arg0: i32, %arg1: i32, %arg2: memref<512x128xf32, #tpu.memory_space<vmem>>, %arg3: memref<128x128xbf16, #tpu.memory_space<vmem>>, %arg4: memref<1x128xf32, #tpu.memory_space<vmem>>, %arg5: memref<512x128xf32, #tpu.memory_space<vmem>>, %arg6: memref<512x128xbf16, #tpu.memory_space<vmem>>) attributes {dimension_semantics = [#tpu.dimension_semantics<parallel>, #tpu.dimension_semantics<arbitrary>], iteration_bounds = array<i64: 2, 1>, scalar_prefetch = 0 : i64, scratch_operands = 1 : i64, tpu.core_type = #tpu.core_type<tc>, window_params = [{transform_indices = @transform_0, window_bounds = array<i64: 512, 128>}, {pipeline_mode = #tpu.pipeline_mode<synchronous>, transform_indices = @transform_1, window_bounds = array<i64: 128, 128>}, {pipeline_mode = #tpu.pipeline_mode<synchronous>, transform_indices = @transform_2, window_bounds = array<i64: 1, 128>}, {transform_indices = @transform_3, window_bounds = array<i64: 512, 128>}]} {
    %c0_i32 = arith.constant 0 : i32
    %0 = arith.cmpi eq, %arg1, %c0_i32 : i32
    %1 = arith.extui %0 : i1 to i32
    %c0_i32_0 = arith.constant 0 : i32
    %2 = arith.cmpi ne, %1, %c0_i32_0 : i32
    scf.if %2 {
      %c0_8 = arith.constant 0 : index
      %c0_9 = arith.constant 0 : index
      %10 = vector.load %arg2[%c0_8, %c0_9] : memref<512x128xf32, #tpu.memory_space<vmem>>, vector<512x128xf32>
      %cst_10 = arith.constant dense<0.000000e+00> : vector<512xf32>
      %11 = vector.multi_reduction <add>, %10, %cst_10 [1] : vector<512x128xf32> to vector<512xf32>
      %12 = vector.shape_cast %11 : vector<512xf32> to vector<512x1xf32>
      %cst_11 = arith.constant 1.280000e+02 : f32
      %13 = vector.broadcast %cst_11 : f32 to vector<512x1xf32>
      %14 = arith.divf %12, %13 : vector<512x1xf32>
      %15 = arith.mulf %10, %10 : vector<512x128xf32>
      %cst_12 = arith.constant dense<0.000000e+00> : vector<512xf32>
      %16 = vector.multi_reduction <add>, %15, %cst_12 [1] : vector<512x128xf32> to vector<512xf32>
      %17 = vector.shape_cast %16 : vector<512xf32> to vector<512x1xf32>
      %cst_13 = arith.constant 1.280000e+02 : f32
      %18 = vector.broadcast %cst_13 : f32 to vector<512x1xf32>
      %19 = arith.divf %17, %18 : vector<512x1xf32>
      %20 = arith.mulf %14, %14 : vector<512x1xf32>
      %21 = arith.subf %19, %20 : vector<512x1xf32>
      %cst_14 = arith.constant 0.000000e+00 : f32
      %22 = vector.broadcast %cst_14 : f32 to vector<512x1xf32>
      %23 = arith.maximumf %21, %22 : vector<512x1xf32>
      %24 = vector.broadcast %14 : vector<512x1xf32> to vector<512x128xf32>
      %25 = arith.subf %10, %24 : vector<512x128xf32>
      %cst_15 = arith.constant 9.99999974E-6 : f32
      %26 = vector.broadcast %cst_15 : f32 to vector<512x1xf32>
      %27 = arith.addf %23, %26 : vector<512x1xf32>
      %28 = math.rsqrt %27 : vector<512x1xf32>
      %29 = vector.broadcast %28 : vector<512x1xf32> to vector<512x128xf32>
      %30 = arith.mulf %25, %29 : vector<512x128xf32>
      %31 = arith.truncf %30 : vector<512x128xf32> to vector<512x128xbf16>
      %c0_16 = arith.constant 0 : index
      %c0_17 = arith.constant 0 : index
      %32 = vector.load %arg6[%c0_16, %c0_17] : memref<512x128xbf16, #tpu.memory_space<vmem>>, vector<512x128xbf16>
      tpu.vector_store %arg6[%c0_16, %c0_17], %31 {strides = array<i32>} : memref<512x128xbf16, #tpu.memory_space<vmem>>, vector<512x128xbf16>,
    } else {
    }
    %c0 = arith.constant 0 : index
    %c0_1 = arith.constant 0 : index
    %3 = vector.load %arg6[%c0, %c0_1] : memref<512x128xbf16, #tpu.memory_space<vmem>>, vector<512x128xbf16>
    %c0_2 = arith.constant 0 : index
    %c0_3 = arith.constant 0 : index
    %4 = vector.load %arg3[%c0_2, %c0_3] : memref<128x128xbf16, #tpu.memory_space<vmem>>, vector<128x128xbf16>
    %cst = arith.constant dense<0.000000e+00> : vector<512x128xf32>
    %5 = tpu.matmul %3, %4, %cst {dimension_numbers = #tpu.dot_dimension_numbers<[1], [0], [0], [1], [0, 0, 1, 1], [], []>} : vector<512x128xbf16>, vector<128x128xbf16>, vector<512x128xf32> -> vector<512x128xf32>
    %c0_4 = arith.constant 0 : index
    %c0_5 = arith.constant 0 : index
    %6 = vector.load %arg4[%c0_4, %c0_5] : memref<1x128xf32, #tpu.memory_space<vmem>>, vector<1x128xf32>
    %7 = vector.broadcast %6 : vector<1x128xf32> to vector<512x128xf32>
    %8 = arith.addf %5, %7 : vector<512x128xf32>
    %c0_6 = arith.constant 0 : index
    %c0_7 = arith.constant 0 : index
    %9 = vector.load %arg5[%c0_6, %c0_7] : memref<512x128xf32, #tpu.memory_space<vmem>>, vector<512x128xf32>
    tpu.vector_store %arg5[%c0_6, %c0_7], %8 {strides = array<i32>} : memref<512x128xf32, #tpu.memory_space<vmem>>, vector<512x128xf32>,
    return
  }
  func.func @transform_0(%arg0: i32, %arg1: i32) -> (i32, i32) {
    %c0_i32 = arith.constant 0 : i32
    %c0_i32_0 = arith.constant 0 : i32
    return %arg0, %c0_i32 : i32, i32
  }
  func.func @transform_1(%arg0: i32, %arg1: i32) -> (i32, i32) {
    %c0_i32 = arith.constant 0 : i32
    %c0_i32_0 = arith.constant 0 : i32
    return %c0_i32, %arg1 : i32, i32
  }
  func.func @transform_2(%arg0: i32, %arg1: i32) -> (i32, i32) {
    %c0_i32 = arith.constant 0 : i32
    %c0_i32_0 = arith.constant 0 : i32
    return %c0_i32, %arg1 : i32, i32
  }
  func.func @transform_3(%arg0: i32, %arg1: i32) -> (i32, i32) {
    %c0_i32 = arith.constant 0 : i32
    return %arg0, %arg1 : i32, i32
  }
}

</mosaic_0001>

<llo_original>
// kernel: tpu_custom_call.1
$region0: #{tpu_custom_call.1}
  #allocation0 [shape = 'u32[]', space=smem, size = 0x4, offset = 0x4, fixed_abs, tag = 'smem constant byte address 0x4 - core index']
  #allocation1 [shape = 'u32[72,128]{1,0:T(1,128)}', space=vmem, size = 0x9000, scoped, tag = 'internal scratch']
  #allocation2 [shape = 'bf16[512,128]{1,0:T(8,128)(2,1)}', space=vmem, size = 0x20000, scoped, tag = 'scratch operand']
  %s0 = inlined_call_operand.hbm [shape: f32[1024,128], index: 0, kind: input, shape index: {}]
  %s1 = inlined_call_operand.hbm [shape: bf16[128,128], index: 1, kind: input, shape index: {}]
  %s2 = inlined_call_operand.vmem [shape: f32[1,128], index: 2, kind: input, shape index: {}]
  %s3 = inlined_call_operand.hbm [shape: f32[1024,128], index: 3, kind: output, shape index: {}]
  %s4 = sld [smem:[#allocation0]]
  $region57: #{tpu_custom_call.1} parent=0
    _
  %s6 = ssub.s32 1, %s4
  %s7 = scalar_select 0, %s6, %s4
  $region1: #{tpu_custom_call.1} parent=0
    #allocation3 [shape = 'u8[524288]{0}', space=vmem, size = 0x80000, scoped, tag = 'input window, operand 0']
    #allocation4 [shape = 's32[2]{0}', space=sflag, size = 0x8, scoped, tag = 'scoped memory for tpu_custom_call.1']
    #allocation5 [shape = 's32[2]{0}', space=sflag, size = 0x8, scoped, tag = 'scoped memory for tpu_custom_call.1']
    #allocation6 [shape = 'u8[32768]{0}', space=vmem, size = 0x8000, scoped, tag = 'input window, operand 1, single buffered']
    #allocation7 [shape = 's32[1]{0}', space=sflag, size = 0x4, scoped, tag = 'scoped memory for tpu_custom_call.1']
    #allocation8 [shape = 'u8[524288]{0}', space=vmem, size = 0x80000, scoped, tag = 'output window, operand 0']
    %8 = vsyncpa [#allocation4], 0
    %s9 = scalar_lea.sflag [#allocation4], 1
    %10 = vsyncpa %s9, 0
    %11 = vsyncpa [#allocation7], 0
    %12 = vsyncpa [#allocation5], 0
    %s13 = scalar_lea.sflag [#allocation5], 1
    %14 = vsyncpa %s13, 0
    loop: start=0, step=1, limit=4
    $region2: #{tpu_custom_call.1} parent=1 // loop_pre_header
      _
    $region3: #{tpu_custom_call.1} parent=1 // loop_header
      %s16 = sphi 0, %s20
      %p17 = scmp.ge.s32.totalorder %s16, 4
      %s23 = sphi 0, %s35
      %s24 = sphi 0, %s31
      %s25 = sphi 0, %s23
      %s26 = sphi 0, %s24
      %s27 = sphi 0, %s25
      %s28 = sphi 0, %s26
      %s38 = sphi 0, %s40
      %s41 = sphi 0, %s38
      %s42 = sphi 0, %s41
      %s58 = sphi 0, %s42
      %s64 = sphi 0, %s66
      %s67 = sphi 0, %s64
      %s68 = sphi 0, %s67
      %s84 = sphi 0, %s68
      %s90 = sphi 0, %s92
      %s93 = sphi 0, %s90
      %s94 = sphi 0, %s93
      %s110 = sphi 0, %s94
      %s118 = sphi 0, %s120
      %s121 = sphi 0, %s118
      %s122 = sphi 0, %s121
      %s138 = sphi 0, %s122
    $region4: #{tpu_custom_call.1} parent=1 // loop_header_branch
      %19 = sbr.rel (%p17) target = $region8
    $region5: #{tpu_custom_call.1} parent=1 // loop_body
      %s21 = ssub.s32 %s16, 1
      %s22 = ssub.s32 %s16, 2
      %s29 = sadd.s32 1, %s24
      %p30 = scmp.ge.s32.totalorder %s29, 1
      %s31 = scalar_select %p30, 0, %s29
      %s32 = sadd.s32 1, %s23
      %s33 = scalar_select %p30, %s32, %s23
      %p34 = scmp.ge.s32.totalorder %s33, 2
      %s35 = scalar_select %p34, 0, %s33
      %s36 = ssub.s32 %s23, %s35
      %p37 = scmp.eq.s32.totalorder %s36, 0
      %s39 = sadd.s32 %s38, 1
      %s40 = scalar_select %p37, %s38, %s39
      %p43 = pneg %p37
      %p44 = scmp.eq.s32.totalorder %s16, 1
      %p45 = por %p43, %p44
      %p46 = scmp.ne.s32.totalorder %s38, %s41
      %p47 = scmp.eq.s32.totalorder %s16, 0
      %p48 = por %p46, %p47
      %p49 = scmp.ne.s32.totalorder %s38, %s41
      %p50 = scmp.eq.s32.totalorder %s21, 1
      %p51 = por %p49, %p50
      %p52 = scmp.ne.s32.totalorder %s41, %s42
      %p53 = scmp.eq.s32.totalorder %s21, 0
      %p54 = por %p52, %p53
      %p55 = scmp.ne.s32.totalorder %s41, %s42
      %p56 = scmp.eq.s32.totalorder %s22, 1
      %p57 = por %p55, %p56
      %p59 = scmp.ne.s32.totalorder %s42, %s58
      %p60 = scmp.eq.s32.totalorder %s22, 0
      %p61 = por %p59, %p60
      %s62 = ssub.s32 %s24, %s31
      %p63 = scmp.eq.s32.totalorder %s62, 0
      %s65 = sadd.s32 %s64, 1
      %s66 = scalar_select %p63, %s64, %s65
      %p69 = pneg %p63
      %p70 = scmp.eq.s32.totalorder %s16, 1
      %p71 = por %p69, %p70
      %p72 = scmp.ne.s32.totalorder %s64, %s67
      %p73 = scmp.eq.s32.totalorder %s16, 0
      %p74 = por %p72, %p73
      %p75 = scmp.ne.s32.totalorder %s64, %s67
      %p76 = scmp.eq.s32.totalorder %s21, 1
      %p77 = por %p75, %p76
      %p78 = scmp.ne.s32.totalorder %s67, %s68
      %p79 = scmp.eq.s32.totalorder %s21, 0
      %p80 = por %p78, %p79
      %p81 = scmp.ne.s32.totalorder %s67, %s68
      %p82 = scmp.eq.s32.totalorder %s22, 1
      %p83 = por %p81, %p82
      %p85 = scmp.ne.s32.totalorder %s68, %s84
      %p86 = scmp.eq.s32.totalorder %s22, 0
      %p87 = por %p85, %p86
      %s88 = ssub.s32 %s24, %s31
      %p89 = scmp.eq.s32.totalorder %s88, 0
      %s91 = sadd.s32 %s90, 1
      %s92 = scalar_select %p89, %s90, %s91
      %p95 = pneg %p89
      %p96 = scmp.eq.s32.totalorder %s16, 1
      %p97 = por %p95, %p96
      %p98 = scmp.ne.s32.totalorder %s90, %s93
      %p99 = scmp.eq.s32.totalorder %s16, 0
      %p100 = por %p98, %p99
      %p101 = scmp.ne.s32.totalorder %s90, %s93
      %p102 = scmp.eq.s32.totalorder %s21, 1
      %p103 = por %p101, %p102
      %p104 = scmp.ne.s32.totalorder %s93, %s94
      %p105 = scmp.eq.s32.totalorder %s21, 0
      %p106 = por %p104, %p105
      %p107 = scmp.ne.s32.totalorder %s93, %s94
      %p108 = scmp.eq.s32.totalorder %s22, 1
      %p109 = por %p107, %p108
      %p111 = scmp.ne.s32.totalorder %s94, %s110
      %p112 = scmp.eq.s32.totalorder %s22, 0
      %p113 = por %p111, %p112
      %s114 = ssub.s32 %s23, %s35
      %s115 = ssub.s32 %s24, %s31
      %s116 = sor.u32 %s114, %s115
      %p117 = scmp.eq.s32.totalorder %s116, 0
      %s119 = sadd.s32 %s118, 1
      %s120 = scalar_select %p117, %s118, %s119
      %p123 = pneg %p117
      %p124 = scmp.eq.s32.totalorder %s16, 1
      %p125 = por %p123, %p124
      %p126 = scmp.ne.s32.totalorder %s118, %s121
      %p127 = scmp.eq.s32.totalorder %s16, 0
      %p128 = por %p126, %p127
      %p129 = scmp.ne.s32.totalorder %s118, %s121
      %p130 = scmp.eq.s32.totalorder %s21, 1
      %p131 = por %p129, %p130
      %p132 = scmp.ne.s32.totalorder %s121, %s122
      %p133 = scmp.eq.s32.totalorder %s21, 0
      %p134 = por %p132, %p133
      %p135 = scmp.ne.s32.totalorder %s121, %s122
      %p136 = scmp.eq.s32.totalorder %s22, 1
      %p137 = por %p135, %p136
      %p139 = scmp.ne.s32.totalorder %s122, %s138
      %p140 = scmp.eq.s32.totalorder %s22, 0
      %p141 = por %p139, %p140
      %p142 = scmp.le.s32.totalorder 1, %s16
      %p143 = scmp.lt.s32.totalorder %s16, 3
      %p144 = pnand %p142, %p143
      %p145 = pneg %p144
      // Predicated region
      $region9: #{tpu_custom_call.1} parent=5 // pred_check
        _
      $region10: #{tpu_custom_call.1} parent=5 // pred_check_branch
        %147 = sbr.rel (%p144) target = $region12
      $region11: #{tpu_custom_call.1} parent=5 // pred_region
        %s148 = ssub.s32 %s16, 1
        // Predicated region
        $region13: #{tpu_custom_call.1} parent=11 // pred_check
          %p149 = pneg %p80
        $region14: #{tpu_custom_call.1} parent=11 // pred_check_branch
          %151 = sbr.rel (%p149) target = $region16
        $region15: #{tpu_custom_call.1} parent=11 // pred_region
          %153 = vsyncadd [#allocation7], 0
          %s154 = smul.addr %s26, 4
          %s155 = scalar_lea.hbm %s1, %s154
          %s156 = sshll.u32 %s155, 4
          %s157 = int_to_ptr.hbm [resolvable:$true] %s156
          %s158 = sshll.u32 [#allocation6], 4
          %s159 = int_to_ptr.vmem [resolvable:$true] %s158
          %164 = dma.hbm_to_vmem [thread:$0]  %s157, 1024, %s159, [#allocation7], 64, 64, 4
        $region16: #{tpu_custom_call.1} parent=11 // pred_fallthru
          _
        // Predicated region
        $region17: #{tpu_custom_call.1} parent=11 // pred_check
          %p165 = pneg %p106
        $region18: #{tpu_custom_call.1} parent=11 // pred_check_branch
          %167 = sbr.rel (%p165) target = $region20
        $region19: #{tpu_custom_call.1} parent=11 // pred_region
          %p168 = scmp.lt.s32.totalorder %s26, 0
          %s169 = scalar_select %p168, %s26, 0
          %s170 = scalar_lea.vmem %s2, %s169
        $region20: #{tpu_custom_call.1} parent=11 // pred_fallthru
          _
      $region12: #{tpu_custom_call.1} parent=5 // pred_fallthru
        _
      %p171 = scmp.lt.s32.totalorder %s16, 2
      // Predicated region
      $region21: #{tpu_custom_call.1} parent=5 // pred_check
        %p172 = pneg %p171
      $region22: #{tpu_custom_call.1} parent=5 // pred_check_branch
        %174 = sbr.rel (%p172) target = $region24
      $region23: #{tpu_custom_call.1} parent=5 // pred_region
        // Predicated region
        $region25: #{tpu_custom_call.1} parent=23 // pred_check
          %p175 = pneg %p48
        $region26: #{tpu_custom_call.1} parent=23 // pred_check_branch
          %177 = sbr.rel (%p175) target = $region28
        $region27: #{tpu_custom_call.1} parent=23 // pred_region
          %s178 = sand.u32 %s38, 1
          %s179 = scalar_lea.sflag [#allocation4], %s178
          %s180 = sand.u32 %s38, 1
          %s181 = smul.addr %s180, 512
          %s182 = scalar_lea.vmem [#allocation3], %s181
          %s183 = smul.u32 64, %s23
          %185 = vsyncadd %s179, 0
          %s186 = smul.addr %s183, 8
          %s187 = scalar_lea.hbm %s0, %s186
          %s188 = sshll.u32 %s187, 4
          %s189 = int_to_ptr.hbm [resolvable:$true] %s188
          %s190 = sshll.u32 %s182, 4
          %s191 = int_to_ptr.vmem [resolvable:$true] %s190
          %196 = dma.hbm_to_vmem [thread:$0]  %s189, 8192, %s191, %s179, 128, 128, 8
        $region28: #{tpu_custom_call.1} parent=23 // pred_fallthru
          _
      $region24: #{tpu_custom_call.1} parent=5 // pred_fallthru
        _
      %p197 = scmp.le.s32.totalorder 1, %s16
      %p198 = scmp.lt.s32.totalorder %s16, 3
      %p199 = pnand %p197, %p198
      %p200 = pneg %p199
      // Predicated region
      $region29: #{tpu_custom_call.1} parent=5 // pred_check
        _
      $region30: #{tpu_custom_call.1} parent=5 // pred_check_branch
        %202 = sbr.rel (%p199) target = $region32
      $region31: #{tpu_custom_call.1} parent=5 // pred_region
        %s203 = ssub.s32 %s16, 1
        %s204 = sand.u32 %s41, 1
        %s205 = scalar_lea.sflag [#allocation4], %s204
        %s206 = sand.u32 %s41, 1
        %s207 = smul.addr %s206, 512
        %s208 = scalar_lea.vmem [#allocation3], %s207
        // Predicated region
        $region33: #{tpu_custom_call.1} parent=31 // pred_check
          %p209 = pneg %p54
        $region34: #{tpu_custom_call.1} parent=31 // pred_check_branch
          %211 = sbr.rel (%p209) target = $region36
        $region35: #{tpu_custom_call.1} parent=31 // pred_region
          %213 = dma.done %s205, 8192
        $region36: #{tpu_custom_call.1} parent=31 // pred_fallthru
          _
        // Predicated region
        $region37: #{tpu_custom_call.1} parent=31 // pred_check
          %p214 = pneg %p80
        $region38: #{tpu_custom_call.1} parent=31 // pred_check_branch
          %216 = sbr.rel (%p214) target = $region40
        $region39: #{tpu_custom_call.1} parent=31 // pred_region
          %218 = dma.done [#allocation7], 1024
        $region40: #{tpu_custom_call.1} parent=31 // pred_fallthru
          _
        %s219 = sand.u32 %s41, 1
        %s220 = scalar_lea.sflag [#allocation4], %s219
        %s221 = sand.u32 %s41, 1
        %s222 = smul.addr %s221, 512
        %s223 = scalar_lea.vmem [#allocation3], %s222
        %p224 = pneg %p54
        %p225 = pneg %p51
        %p226 = pneg %p80
        %p227 = pneg %p77
        %p228 = scmp.lt.s32.totalorder %s26, 0
        %s229 = scalar_select %p228, %s26, 0
        %s230 = scalar_lea.vmem %s2, %s229
        %p231 = pneg %p106
        %p232 = pneg %p103
        %p233 = pneg %p134
        %p234 = pneg %p131
        %s235 = sand.u32 %s121, 1
        %s236 = scalar_lea.sflag [#allocation5], %s235
        %s237 = sand.u32 %s121, 1
        %s238 = smul.addr %s237, 512
        %s239 = scalar_lea.vmem [#allocation8], %s238
        %s240 = smul.u32 64, %s25
        %p241 = scmp.lt.s32.totalorder %s26, 0
        %s242 = scalar_select %p241, %s26, 0
        %s243 = scalar_lea.vmem %s2, %s242
        %s244 = smul.u32 64, %s25
        %p245 = scmp.eq.s32.totalorder %s26, 0
        // Predicated region
        $region41: #{tpu_custom_call.1} parent=31 // pred_check
          %p246 = pneg %p245
        $region42: #{tpu_custom_call.1} parent=31 // pred_check_branch
          %248 = sbr.rel (%p246) target = $region44
        $region43: #{tpu_custom_call.1} parent=31 // pred_region
          %v249 = vld [vmem:[%s208] sm:$0xff]
          %v250 = vld [vmem:[%s208 + $0x8] sm:$0xff]
          %v251 = vld [vmem:[%s208 + $0x10] sm:$0xff]
          %v252 = vld [vmem:[%s208 + $0x18] sm:$0xff]
          %v253 = vld [vmem:[%s208 + $0x20] sm:$0xff]
          %v254 = vld [vmem:[%s208 + $0x28] sm:$0xff]
          %v255 = vld [vmem:[%s208 + $0x30] sm:$0xff]
          %v256 = vld [vmem:[%s208 + $0x38] sm:$0xff]
          %v257 = vld [vmem:[%s208 + $0x40] sm:$0xff]
          %v258 = vld [vmem:[%s208 + $0x48] sm:$0xff]
          %v259 = vld [vmem:[%s208 + $0x50] sm:$0xff]
          %v260 = vld [vmem:[%s208 + $0x58] sm:$0xff]
          %v261 = vld [vmem:[%s208 + $0x60] sm:$0xff]
          %v262 = vld [vmem:[%s208 + $0x68] sm:$0xff]
          %v263 = vld [vmem:[%s208 + $0x70] sm:$0xff]
          %v264 = vld [vmem:[%s208 + $0x78] sm:$0xff]
          %v265 = vld [vmem:[%s208 + $0x80] sm:$0xff]
          %v266 = vld [vmem:[%s208 + $0x88] sm:$0xff]
          %v267 = vld [vmem:[%s208 + $0x90] sm:$0xff]
          %v268 = vld [vmem:[%s208 + $0x98] sm:$0xff]
          %v269 = vld [vmem:[%s208 + $0xa0] sm:$0xff]
          %v270 = vld [vmem:[%s208 + $0xa8] sm:$0xff]
          %v271 = vld [vmem:[%s208 + $0xb0] sm:$0xff]
          %v272 = vld [vmem:[%s208 + $0xb8] sm:$0xff]
          %v273 = vld [vmem:[%s208 + $0xc0] sm:$0xff]
          %v274 = vld [vmem:[%s208 + $0xc8] sm:$0xff]
          %v275 = vld [vmem:[%s208 + $0xd0] sm:$0xff]
          %v276 = vld [vmem:[%s208 + $0xd8] sm:$0xff]
          %v277 = vld [vmem:[%s208 + $0xe0] sm:$0xff]
          %v278 = vld [vmem:[%s208 + $0xe8] sm:$0xff]
          %v279 = vld [vmem:[%s208 + $0xf0] sm:$0xff]
          %v280 = vld [vmem:[%s208 + $0xf8] sm:$0xff]
          %v281 = vld [vmem:[%s208 + $0x100] sm:$0xff]
          %v282 = vld [vmem:[%s208 + $0x108] sm:$0xff]
          %v283 = vld [vmem:[%s208 + $0x110] sm:$0xff]
          %v284 = vld [vmem:[%s208 + $0x118] sm:$0xff]
          %v285 = vld [vmem:[%s208 + $0x120] sm:$0xff]
          %v286 = vld [vmem:[%s208 + $0x128] sm:$0xff]
          %v287 = vld [vmem:[%s208 + $0x130] sm:$0xff]
          %v288 = vld [vmem:[%s208 + $0x138] sm:$0xff]
          %v289 = vld [vmem:[%s208 + $0x140] sm:$0xff]
          %v290 = vld [vmem:[%s208 + $0x148] sm:$0xff]
          %v291 = vld [vmem:[%s208 + $0x150] sm:$0xff]
          %v292 = vld [vmem:[%s208 + $0x158] sm:$0xff]
          %v293 = vld [vmem:[%s208 + $0x160] sm:$0xff]
          %v294 = vld [vmem:[%s208 + $0x168] sm:$0xff]
          %v295 = vld [vmem:[%s208 + $0x170] sm:$0xff]
          %v296 = vld [vmem:[%s208 + $0x178] sm:$0xff]
          %v297 = vld [vmem:[%s208 + $0x180] sm:$0xff]
          %v298 = vld [vmem:[%s208 + $0x188] sm:$0xff]
          %v299 = vld [vmem:[%s208 + $0x190] sm:$0xff]
          %v300 = vld [vmem:[%s208 + $0x198] sm:$0xff]
          %v301 = vld [vmem:[%s208 + $0x1a0] sm:$0xff]
          %v302 = vld [vmem:[%s208 + $0x1a8] sm:$0xff]
          %v303 = vld [vmem:[%s208 + $0x1b0] sm:$0xff]
          %v304 = vld [vmem:[%s208 + $0x1b8] sm:$0xff]
          %v305 = vld [vmem:[%s208 + $0x1c0] sm:$0xff]
          %v306 = vld [vmem:[%s208 + $0x1c8] sm:$0xff]
          %v307 = vld [vmem:[%s208 + $0x1d0] sm:$0xff]
          %v308 = vld [vmem:[%s208 + $0x1d8] sm:$0xff]
          %v309 = vld [vmem:[%s208 + $0x1e0] sm:$0xff]
          %v310 = vld [vmem:[%s208 + $0x1e8] sm:$0xff]
          %v311 = vld [vmem:[%s208 + $0x1f0] sm:$0xff]
          %v312 = vld [vmem:[%s208 + $0x1f8] sm:$0xff]
          %313 = vadd.xlane.f32.xlu0 %v249
          %v314 = vpop.xlane.xlu0 %313
          %315 = vadd.xlane.f32.xlu0 %v250
          %v316 = vpop.xlane.xlu0 %315
          %317 = vadd.xlane.f32.xlu0 %v251
          %v318 = vpop.xlane.xlu0 %317
          %319 = vadd.xlane.f32.xlu0 %v252
          %v320 = vpop.xlane.xlu0 %319
          %321 = vadd.xlane.f32.xlu0 %v253
          %v322 = vpop.xlane.xlu0 %321
          %323 = vadd.xlane.f32.xlu0 %v254
          %v324 = vpop.xlane.xlu0 %323
          %325 = vadd.xlane.f32.xlu0 %v255
          %v326 = vpop.xlane.xlu0 %325
          %327 = vadd.xlane.f32.xlu0 %v256
          %v328 = vpop.xlane.xlu0 %327
          %329 = vadd.xlane.f32.xlu0 %v257
          %v330 = vpop.xlane.xlu0 %329
          %331 = vadd.xlane.f32.xlu0 %v258
          %v332 = vpop.xlane.xlu0 %331
          %333 = vadd.xlane.f32.xlu0 %v259
          %v334 = vpop.xlane.xlu0 %333
          %335 = vadd.xlane.f32.xlu0 %v260
          %v336 = vpop.xlane.xlu0 %335
          %337 = vadd.xlane.f32.xlu0 %v261
          %v338 = vpop.xlane.xlu0 %337
          %339 = vadd.xlane.f32.xlu0 %v262
          %v340 = vpop.xlane.xlu0 %339
          %341 = vadd.xlane.f32.xlu0 %v263
          %v342 = vpop.xlane.xlu0 %341
          %343 = vadd.xlane.f32.xlu0 %v264
          %v344 = vpop.xlane.xlu0 %343
          %345 = vadd.xlane.f32.xlu0 %v265
          %v346 = vpop.xlane.xlu0 %345
          %347 = vadd.xlane.f32.xlu0 %v266
          %v348 = vpop.xlane.xlu0 %347
          %349 = vadd.xlane.f32.xlu0 %v267
          %v350 = vpop.xlane.xlu0 %349
          %351 = vadd.xlane.f32.xlu0 %v268
          %v352 = vpop.xlane.xlu0 %351
          %353 = vadd.xlane.f32.xlu0 %v269
          %v354 = vpop.xlane.xlu0 %353
          %355 = vadd.xlane.f32.xlu0 %v270
          %v356 = vpop.xlane.xlu0 %355
          %357 = vadd.xlane.f32.xlu0 %v271
          %v358 = vpop.xlane.xlu0 %357
          %359 = vadd.xlane.f32.xlu0 %v272
          %v360 = vpop.xlane.xlu0 %359
          %361 = vadd.xlane.f32.xlu0 %v273
          %v362 = vpop.xlane.xlu0 %361
          %363 = vadd.xlane.f32.xlu0 %v274
          %v364 = vpop.xlane.xlu0 %363
          %365 = vadd.xlane.f32.xlu0 %v275
          %v366 = vpop.xlane.xlu0 %365
          %367 = vadd.xlane.f32.xlu0 %v276
          %v368 = vpop.xlane.xlu0 %367
          %369 = vadd.xlane.f32.xlu0 %v277
          %v370 = vpop.xlane.xlu0 %369
          %371 = vadd.xlane.f32.xlu0 %v278
          %v372 = vpop.xlane.xlu0 %371
          %373 = vadd.xlane.f32.xlu0 %v279
          %v374 = vpop.xlane.xlu0 %373
          %375 = vadd.xlane.f32.xlu0 %v280
          %v376 = vpop.xlane.xlu0 %375
          %377 = vadd.xlane.f32.xlu0 %v281
          %v378 = vpop.xlane.xlu0 %377
          %379 = vadd.xlane.f32.xlu0 %v282
          %v380 = vpop.xlane.xlu0 %379
          %381 = vadd.xlane.f32.xlu0 %v283
          %v382 = vpop.xlane.xlu0 %381
          %383 = vadd.xlane.f32.xlu0 %v284
          %v384 = vpop.xlane.xlu0 %383
          %385 = vadd.xlane.f32.xlu0 %v285
          %v386 = vpop.xlane.xlu0 %385
          %387 = vadd.xlane.f32.xlu0 %v286
          %v388 = vpop.xlane.xlu0 %387
          %389 = vadd.xlane.f32.xlu0 %v287
          %v390 = vpop.xlane.xlu0 %389
          %391 = vadd.xlane.f32.xlu0 %v288
          %v392 = vpop.xlane.xlu0 %391
          %393 = vadd.xlane.f32.xlu0 %v289
          %v394 = vpop.xlane.xlu0 %393
          %395 = vadd.xlane.f32.xlu0 %v290
          %v396 = vpop.xlane.xlu0 %395
          %397 = vadd.xlane.f32.xlu0 %v291
          %v398 = vpop.xlane.xlu0 %397
          %399 = vadd.xlane.f32.xlu0 %v292
          %v400 = vpop.xlane.xlu0 %399
          %401 = vadd.xlane.f32.xlu0 %v293
          %v402 = vpop.xlane.xlu0 %401
          %403 = vadd.xlane.f32.xlu0 %v294
          %v404 = vpop.xlane.xlu0 %403
          %405 = vadd.xlane.f32.xlu0 %v295
          %v406 = vpop.xlane.xlu0 %405
          %407 = vadd.xlane.f32.xlu0 %v296
          %v408 = vpop.xlane.xlu0 %407
          %409 = vadd.xlane.f32.xlu0 %v297
          %v410 = vpop.xlane.xlu0 %409
          %411 = vadd.xlane.f32.xlu0 %v298
          %v412 = vpop.xlane.xlu0 %411
          %413 = vadd.xlane.f32.xlu0 %v299
          %v414 = vpop.xlane.xlu0 %413
          %415 = vadd.xlane.f32.xlu0 %v300
          %v416 = vpop.xlane.xlu0 %415
          %417 = vadd.xlane.f32.xlu0 %v301
          %v418 = vpop.xlane.xlu0 %417
          %419 = vadd.xlane.f32.xlu0 %v302
          %v420 = vpop.xlane.xlu0 %419
          %421 = vadd.xlane.f32.xlu0 %v303
          %v422 = vpop.xlane.xlu0 %421
          %423 = vadd.xlane.f32.xlu0 %v304
          %v424 = vpop.xlane.xlu0 %423
          %425 = vadd.xlane.f32.xlu0 %v305
          %v426 = vpop.xlane.xlu0 %425
          %427 = vadd.xlane.f32.xlu0 %v306
          %v428 = vpop.xlane.xlu0 %427
          %429 = vadd.xlane.f32.xlu0 %v307
          %v430 = vpop.xlane.xlu0 %429
          %431 = vadd.xlane.f32.xlu0 %v308
          %v432 = vpop.xlane.xlu0 %431
          %433 = vadd.xlane.f32.xlu0 %v309
          %v434 = vpop.xlane.xlu0 %433
          %435 = vadd.xlane.f32.xlu0 %v310
          %v436 = vpop.xlane.xlu0 %435
          %437 = vadd.xlane.f32.xlu0 %v311
          %v438 = vpop.xlane.xlu0 %437
          %439 = vadd.xlane.f32.xlu0 %v312
          %v440 = vpop.xlane.xlu0 %439
          %v441 = vrcp.pop 128.0
          %v442 = vmul.f32 128.0, %v441
          %v443 = vsub.f32 1.0, %v442
          %v444 = vmul.f32 %v441, %v443
          %v445 = vadd.f32 %v441, %v444
          %vm446 = vweird.f32 %v441
          %v447 = vsel %vm446, %v441, %v445
          %v448 = vmul.f32 %v314, %v447
          %v449 = vmul.f32 %v316, %v447
          %v450 = vmul.f32 %v318, %v447
          %v451 = vmul.f32 %v320, %v447
          %v452 = vmul.f32 %v322, %v447
          %v453 = vmul.f32 %v324, %v447
          %v454 = vmul.f32 %v326, %v447
          %v455 = vmul.f32 %v328, %v447
          %v456 = vmul.f32 %v330, %v447
          %v457 = vmul.f32 %v332, %v447
          %v458 = vmul.f32 %v334, %v447
          %v459 = vmul.f32 %v336, %v447
          %v460 = vmul.f32 %v338, %v447
          %v461 = vmul.f32 %v340, %v447
          %v462 = vmul.f32 %v342, %v447
          %v463 = vmul.f32 %v344, %v447
          %v464 = vmul.f32 %v346, %v447
          %v465 = vmul.f32 %v348, %v447
          %v466 = vmul.f32 %v350, %v447
          %v467 = vmul.f32 %v352, %v447
          %v468 = vmul.f32 %v354, %v447
          %v469 = vmul.f32 %v356, %v447
          %v470 = vmul.f32 %v358, %v447
          %v471 = vmul.f32 %v360, %v447
          %v472 = vmul.f32 %v362, %v447
          %v473 = vmul.f32 %v364, %v447
          %v474 = vmul.f32 %v366, %v447
          %v475 = vmul.f32 %v368, %v447
          %v476 = vmul.f32 %v370, %v447
          %v477 = vmul.f32 %v372, %v447
          %v478 = vmul.f32 %v374, %v447
          %v479 = vmul.f32 %v376, %v447
          %v480 = vmul.f32 %v378, %v447
          %v481 = vmul.f32 %v380, %v447
          %v482 = vmul.f32 %v382, %v447
          %v483 = vmul.f32 %v384, %v447
          %v484 = vmul.f32 %v386, %v447
          %v485 = vmul.f32 %v388, %v447
          %v486 = vmul.f32 %v390, %v447
          %v487 = vmul.f32 %v392, %v447
          %v488 = vmul.f32 %v394, %v447
          %v489 = vmul.f32 %v396, %v447
          %v490 = vmul.f32 %v398, %v447
          %v491 = vmul.f32 %v400, %v447
          %v492 = vmul.f32 %v402, %v447
          %v493 = vmul.f32 %v404, %v447
          %v494 = vmul.f32 %v406, %v447
          %v495 = vmul.f32 %v408, %v447
          %v496 = vmul.f32 %v410, %v447
          %v497 = vmul.f32 %v412, %v447
          %v498 = vmul.f32 %v414, %v447
          %v499 = vmul.f32 %v416, %v447
          %v500 = vmul.f32 %v418, %v447
          %v501 = vmul.f32 %v420, %v447
          %v502 = vmul.f32 %v422, %v447
          %v503 = vmul.f32 %v424, %v447
          %v504 = vmul.f32 %v426, %v447
          %v505 = vmul.f32 %v428, %v447
          %v506 = vmul.f32 %v430, %v447
          %v507 = vmul.f32 %v432, %v447
          %v508 = vmul.f32 %v434, %v447
          %v509 = vmul.f32 %v436, %v447
          %v510 = vmul.f32 %v438, %v447
          %v511 = vmul.f32 %v440, %v447
          %v512 = vmul.f32 %v249, %v249
          %v513 = vmul.f32 %v250, %v250
          %v514 = vmul.f32 %v251, %v251
          %v515 = vmul.f32 %v252, %v252
          %v516 = vmul.f32 %v253, %v253
          %v517 = vmul.f32 %v254, %v254
          %v518 = vmul.f32 %v255, %v255
          %v519 = vmul.f32 %v256, %v256
          %v520 = vmul.f32 %v257, %v257
          %v521 = vmul.f32 %v258, %v258
          %v522 = vmul.f32 %v259, %v259
          %v523 = vmul.f32 %v260, %v260
          %v524 = vmul.f32 %v261, %v261
          %v525 = vmul.f32 %v262, %v262
          %v526 = vmul.f32 %v263, %v263
          %v527 = vmul.f32 %v264, %v264
          %v528 = vmul.f32 %v265, %v265
          %v529 = vmul.f32 %v266, %v266
          %v530 = vmul.f32 %v267, %v267
          %v531 = vmul.f32 %v268, %v268
          %v532 = vmul.f32 %v269, %v269
          %v533 = vmul.f32 %v270, %v270
          %v534 = vmul.f32 %v271, %v271
          %v535 = vmul.f32 %v272, %v272
          %v536 = vmul.f32 %v273, %v273
          %v537 = vmul.f32 %v274, %v274
          %v538 = vmul.f32 %v275, %v275
          %v539 = vmul.f32 %v276, %v276
          %v540 = vmul.f32 %v277, %v277
          %v541 = vmul.f32 %v278, %v278
          %v542 = vmul.f32 %v279, %v279
          %v543 = vmul.f32 %v280, %v280
          %v544 = vmul.f32 %v281, %v281
          %v545 = vmul.f32 %v282, %v282
          %v546 = vmul.f32 %v283, %v283
          %v547 = vmul.f32 %v284, %v284
          %v548 = vmul.f32 %v285, %v285
          %v549 = vmul.f32 %v286, %v286
          %v550 = vmul.f32 %v287, %v287
          %v551 = vmul.f32 %v288, %v288
          %v552 = vmul.f32 %v289, %v289
          %v553 = vmul.f32 %v290, %v290
          %v554 = vmul.f32 %v291, %v291
          %v555 = vmul.f32 %v292, %v292
          %v556 = vmul.f32 %v293, %v293
          %v557 = vmul.f32 %v294, %v294
          %v558 = vmul.f32 %v295, %v295
          %v559 = vmul.f32 %v296, %v296
          %v560 = vmul.f32 %v297, %v297
          %v561 = vmul.f32 %v298, %v298
          %v562 = vmul.f32 %v299, %v299
          %v563 = vmul.f32 %v300, %v300
          %v564 = vmul.f32 %v301, %v301
          %v565 = vmul.f32 %v302, %v302
          %v566 = vmul.f32 %v303, %v303
          %v567 = vmul.f32 %v304, %v304
          %v568 = vmul.f32 %v305, %v305
          %v569 = vmul.f32 %v306, %v306
          %v570 = vmul.f32 %v307, %v307
          %v571 = vmul.f32 %v308, %v308
          %v572 = vmul.f32 %v309, %v309
          %v573 = vmul.f32 %v310, %v310
          %v574 = vmul.f32 %v311, %v311
          %v575 = vmul.f32 %v312, %v312
          %576 = vadd.xlane.f32.xlu0 %v512
          %v577 = vpop.xlane.xlu0 %576
          %578 = vadd.xlane.f32.xlu0 %v513
          %v579 = vpop.xlane.xlu0 %578
          %580 = vadd.xlane.f32.xlu0 %v514
          %v581 = vpop.xlane.xlu0 %580
          %582 = vadd.xlane.f32.xlu0 %v515
          %v583 = vpop.xlane.xlu0 %582
          %584 = vadd.xlane.f32.xlu0 %v516
          %v585 = vpop.xlane.xlu0 %584
          %586 = vadd.xlane.f32.xlu0 %v517
          %v587 = vpop.xlane.xlu0 %586
          %588 = vadd.xlane.f32.xlu0 %v518
          %v589 = vpop.xlane.xlu0 %588
          %590 = vadd.xlane.f32.xlu0 %v519
          %v591 = vpop.xlane.xlu0 %590
          %592 = vadd.xlane.f32.xlu0 %v520
          %v593 = vpop.xlane.xlu0 %592
          %594 = vadd.xlane.f32.xlu0 %v521
          %v595 = vpop.xlane.xlu0 %594
          %596 = vadd.xlane.f32.xlu0 %v522
          %v597 = vpop.xlane.xlu0 %596
          %598 = vadd.xlane.f32.xlu0 %v523
          %v599 = vpop.xlane.xlu0 %598
          %600 = vadd.xlane.f32.xlu0 %v524
          %v601 = vpop.xlane.xlu0 %600
          %602 = vadd.xlane.f32.xlu0 %v525
          %v603 = vpop.xlane.xlu0 %602
          %604 = vadd.xlane.f32.xlu0 %v526
          %v605 = vpop.xlane.xlu0 %604
          %606 = vadd.xlane.f32.xlu0 %v527
          %v607 = vpop.xlane.xlu0 %606
          %608 = vadd.xlane.f32.xlu0 %v528
          %v609 = vpop.xlane.xlu0 %608
          %610 = vadd.xlane.f32.xlu0 %v529
          %v611 = vpop.xlane.xlu0 %610
          %612 = vadd.xlane.f32.xlu0 %v530
          %v613 = vpop.xlane.xlu0 %612
          %614 = vadd.xlane.f32.xlu0 %v531
          %v615 = vpop.xlane.xlu0 %614
          %616 = vadd.xlane.f32.xlu0 %v532
          %v617 = vpop.xlane.xlu0 %616
          %618 = vadd.xlane.f32.xlu0 %v533
          %v619 = vpop.xlane.xlu0 %618
          %620 = vadd.xlane.f32.xlu0 %v534
          %v621 = vpop.xlane.xlu0 %620
          %622 = vadd.xlane.f32.xlu0 %v535
          %v623 = vpop.xlane.xlu0 %622
          %624 = vadd.xlane.f32.xlu0 %v536
          %v625 = vpop.xlane.xlu0 %624
          %626 = vadd.xlane.f32.xlu0 %v537
          %v627 = vpop.xlane.xlu0 %626
          %628 = vadd.xlane.f32.xlu0 %v538
          %v629 = vpop.xlane.xlu0 %628
          %630 = vadd.xlane.f32.xlu0 %v539
          %v631 = vpop.xlane.xlu0 %630
          %632 = vadd.xlane.f32.xlu0 %v540
          %v633 = vpop.xlane.xlu0 %632
          %634 = vadd.xlane.f32.xlu0 %v541
          %v635 = vpop.xlane.xlu0 %634
          %636 = vadd.xlane.f32.xlu0 %v542
          %v637 = vpop.xlane.xlu0 %636
          %638 = vadd.xlane.f32.xlu0 %v543
          %v639 = vpop.xlane.xlu0 %638
          %640 = vadd.xlane.f32.xlu0 %v544
          %v641 = vpop.xlane.xlu0 %640
          %642 = vadd.xlane.f32.xlu0 %v545
          %v643 = vpop.xlane.xlu0 %642
          %644 = vadd.xlane.f32.xlu0 %v546
          %v645 = vpop.xlane.xlu0 %644
          %646 = vadd.xlane.f32.xlu0 %v547
          %v647 = vpop.xlane.xlu0 %646
          %648 = vadd.xlane.f32.xlu0 %v548
          %v649 = vpop.xlane.xlu0 %648
          %650 = vadd.xlane.f32.xlu0 %v549
          %v651 = vpop.xlane.xlu0 %650
          %652 = vadd.xlane.f32.xlu0 %v550
          %v653 = vpop.xlane.xlu0 %652
          %654 = vadd.xlane.f32.xlu0 %v551
          %v655 = vpop.xlane.xlu0 %654
          %656 = vadd.xlane.f32.xlu0 %v552
          %v657 = vpop.xlane.xlu0 %656
          %658 = vadd.xlane.f32.xlu0 %v553
          %v659 = vpop.xlane.xlu0 %658
          %660 = vadd.xlane.f32.xlu0 %v554
          %v661 = vpop.xlane.xlu0 %660
          %662 = vadd.xlane.f32.xlu0 %v555
          %v663 = vpop.xlane.xlu0 %662
          %664 = vadd.xlane.f32.xlu0 %v556
          %v665 = vpop.xlane.xlu0 %664
          %666 = vadd.xlane.f32.xlu0 %v557
          %v667 = vpop.xlane.xlu0 %666
          %668 = vadd.xlane.f32.xlu0 %v558
          %v669 = vpop.xlane.xlu0 %668
          %670 = vadd.xlane.f32.xlu0 %v559
          %v671 = vpop.xlane.xlu0 %670
          %672 = vadd.xlane.f32.xlu0 %v560
          %v673 = vpop.xlane.xlu0 %672
          %674 = vadd.xlane.f32.xlu0 %v561
          %v675 = vpop.xlane.xlu0 %674
          %676 = vadd.xlane.f32.xlu0 %v562
          %v677 = vpop.xlane.xlu0 %676
          %678 = vadd.xlane.f32.xlu0 %v563
          %v679 = vpop.xlane.xlu0 %678
          %680 = vadd.xlane.f32.xlu0 %v564
          %v681 = vpop.xlane.xlu0 %680
          %682 = vadd.xlane.f32.xlu0 %v565
          %v683 = vpop.xlane.xlu0 %682
          %684 = vadd.xlane.f32.xlu0 %v566
          %v685 = vpop.xlane.xlu0 %684
          %686 = vadd.xlane.f32.xlu0 %v567
          %v687 = vpop.xlane.xlu0 %686
          %688 = vadd.xlane.f32.xlu0 %v568
          %v689 = vpop.xlane.xlu0 %688
          %690 = vadd.xlane.f32.xlu0 %v569
          %v691 = vpop.xlane.xlu0 %690
          %692 = vadd.xlane.f32.xlu0 %v570
          %v693 = vpop.xlane.xlu0 %692
          %694 = vadd.xlane.f32.xlu0 %v571
          %v695 = vpop.xlane.xlu0 %694
          %696 = vadd.xlane.f32.xlu0 %v572
          %v697 = vpop.xlane.xlu0 %696
          %698 = vadd.xlane.f32.xlu0 %v573
          %v699 = vpop.xlane.xlu0 %698
          %700 = vadd.xlane.f32.xlu0 %v574
          %v701 = vpop.xlane.xlu0 %700
          %702 = vadd.xlane.f32.xlu0 %v575
          %v703 = vpop.xlane.xlu0 %702
          %v704 = vmul.f32 %v577, %v447
          %v705 = vmul.f32 %v579, %v447
          %v706 = vmul.f32 %v581, %v447
          %v707 = vmul.f32 %v583, %v447
          %v708 = vmul.f32 %v585, %v447
          %v709 = vmul.f32 %v587, %v447
          %v710 = vmul.f32 %v589, %v447
          %v711 = vmul.f32 %v591, %v447
          %v712 = vmul.f32 %v593, %v447
          %v713 = vmul.f32 %v595, %v447
          %v714 = vmul.f32 %v597, %v447
          %v715 = vmul.f32 %v599, %v447
          %v716 = vmul.f32 %v601, %v447
          %v717 = vmul.f32 %v603, %v447
          %v718 = vmul.f32 %v605, %v447
          %v719 = vmul.f32 %v607, %v447
          %v720 = vmul.f32 %v609, %v447
          %v721 = vmul.f32 %v611, %v447
          %v722 = vmul.f32 %v613, %v447
          %v723 = vmul.f32 %v615, %v447
          %v724 = vmul.f32 %v617, %v447
          %v725 = vmul.f32 %v619, %v447
          %v726 = vmul.f32 %v621, %v447
          %v727 = vmul.f32 %v623, %v447
          %v728 = vmul.f32 %v625, %v447
          %v729 = vmul.f32 %v627, %v447
          %v730 = vmul.f32 %v629, %v447
          %v731 = vmul.f32 %v631, %v447
          %v732 = vmul.f32 %v633, %v447
          %v733 = vmul.f32 %v635, %v447
          %v734 = vmul.f32 %v637, %v447
          %v735 = vmul.f32 %v639, %v447
          %v736 = vmul.f32 %v641, %v447
          %v737 = vmul.f32 %v643, %v447
          %v738 = vmul.f32 %v645, %v447
          %v739 = vmul.f32 %v647, %v447
          %v740 = vmul.f32 %v649, %v447
          %v741 = vmul.f32 %v651, %v447
          %v742 = vmul.f32 %v653, %v447
          %v743 = vmul.f32 %v655, %v447
          %v744 = vmul.f32 %v657, %v447
          %v745 = vmul.f32 %v659, %v447
          %v746 = vmul.f32 %v661, %v447
          %v747 = vmul.f32 %v663, %v447
          %v748 = vmul.f32 %v665, %v447
          %v749 = vmul.f32 %v667, %v447
          %v750 = vmul.f32 %v669, %v447
          %v751 = vmul.f32 %v671, %v447
          %v752 = vmul.f32 %v673, %v447
          %v753 = vmul.f32 %v675, %v447
          %v754 = vmul.f32 %v677, %v447
          %v755 = vmul.f32 %v679, %v447
          %v756 = vmul.f32 %v681, %v447
          %v757 = vmul.f32 %v683, %v447
          %v758 = vmul.f32 %v685, %v447
          %v759 = vmul.f32 %v687, %v447
          %v760 = vmul.f32 %v689, %v447
          %v761 = vmul.f32 %v691, %v447
          %v762 = vmul.f32 %v693, %v447
          %v763 = vmul.f32 %v695, %v447
          %v764 = vmul.f32 %v697, %v447
          %v765 = vmul.f32 %v699, %v447
          %v766 = vmul.f32 %v701, %v447
          %v767 = vmul.f32 %v703, %v447
          %v768 = vmul.f32 %v448, %v448
          %v769 = vmul.f32 %v449, %v449
          %v770 = vmul.f32 %v450, %v450
          %v771 = vmul.f32 %v451, %v451
          %v772 = vmul.f32 %v452, %v452
          %v773 = vmul.f32 %v453, %v453
          %v774 = vmul.f32 %v454, %v454
          %v775 = vmul.f32 %v455, %v455
          %v776 = vmul.f32 %v456, %v456
          %v777 = vmul.f32 %v457, %v457
          %v778 = vmul.f32 %v458, %v458
          %v779 = vmul.f32 %v459, %v459
          %v780 = vmul.f32 %v460, %v460
          %v781 = vmul.f32 %v461, %v461
          %v782 = vmul.f32 %v462, %v462
          %v783 = vmul.f32 %v463, %v463
          %v784 = vmul.f32 %v464, %v464
          %v785 = vmul.f32 %v465, %v465
          %v786 = vmul.f32 %v466, %v466
          %v787 = vmul.f32 %v467, %v467
          %v788 = vmul.f32 %v468, %v468
          %v789 = vmul.f32 %v469, %v469
          %v790 = vmul.f32 %v470, %v470
          %v791 = vmul.f32 %v471, %v471
          %v792 = vmul.f32 %v472, %v472
          %v793 = vmul.f32 %v473, %v473
          %v794 = vmul.f32 %v474, %v474
          %v795 = vmul.f32 %v475, %v475
          %v796 = vmul.f32 %v476, %v476
          %v797 = vmul.f32 %v477, %v477
          %v798 = vmul.f32 %v478, %v478
          %v799 = vmul.f32 %v479, %v479
          %v800 = vmul.f32 %v480, %v480
          %v801 = vmul.f32 %v481, %v481
          %v802 = vmul.f32 %v482, %v482
          %v803 = vmul.f32 %v483, %v483
          %v804 = vmul.f32 %v484, %v484
          %v805 = vmul.f32 %v485, %v485
          %v806 = vmul.f32 %v486, %v486
          %v807 = vmul.f32 %v487, %v487
          %v808 = vmul.f32 %v488, %v488
          %v809 = vmul.f32 %v489, %v489
          %v810 = vmul.f32 %v490, %v490
          %v811 = vmul.f32 %v491, %v491
          %v812 = vmul.f32 %v492, %v492
          %v813 = vmul.f32 %v493, %v493
          %v814 = vmul.f32 %v494, %v494
          %v815 = vmul.f32 %v495, %v495
          %v816 = vmul.f32 %v496, %v496
          %v817 = vmul.f32 %v497, %v497
          %v818 = vmul.f32 %v498, %v498
          %v819 = vmul.f32 %v499, %v499
          %v820 = vmul.f32 %v500, %v500
          %v821 = vmul.f32 %v501, %v501
          %v822 = vmul.f32 %v502, %v502
          %v823 = vmul.f32 %v503, %v503
          %v824 = vmul.f32 %v504, %v504
          %v825 = vmul.f32 %v505, %v505
          %v826 = vmul.f32 %v506, %v506
          %v827 = vmul.f32 %v507, %v507
          %v828 = vmul.f32 %v508, %v508
          %v829 = vmul.f32 %v509, %v509
          %v830 = vmul.f32 %v510, %v510
          %v831 = vmul.f32 %v511, %v511
          %v832 = vsub.f32 %v704, %v768
          %v833 = vsub.f32 %v705, %v769
          %v834 = vsub.f32 %v706, %v770
          %v835 = vsub.f32 %v707, %v771
          %v836 = vsub.f32 %v708, %v772
          %v837 = vsub.f32 %v709, %v773
          %v838 = vsub.f32 %v710, %v774
          %v839 = vsub.f32 %v711, %v775
          %v840 = vsub.f32 %v712, %v776
          %v841 = vsub.f32 %v713, %v777
          %v842 = vsub.f32 %v714, %v778
          %v843 = vsub.f32 %v715, %v779
          %v844 = vsub.f32 %v716, %v780
          %v845 = vsub.f32 %v717, %v781
          %v846 = vsub.f32 %v718, %v782
          %v847 = vsub.f32 %v719, %v783
          %v848 = vsub.f32 %v720, %v784
          %v849 = vsub.f32 %v721, %v785
          %v850 = vsub.f32 %v722, %v786
          %v851 = vsub.f32 %v723, %v787
          %v852 = vsub.f32 %v724, %v788
          %v853 = vsub.f32 %v725, %v789
          %v854 = vsub.f32 %v726, %v790
          %v855 = vsub.f32 %v727, %v791
          %v856 = vsub.f32 %v728, %v792
          %v857 = vsub.f32 %v729, %v793
          %v858 = vsub.f32 %v730, %v794
          %v859 = vsub.f32 %v731, %v795
          %v860 = vsub.f32 %v732, %v796
          %v861 = vsub.f32 %v733, %v797
          %v862 = vsub.f32 %v734, %v798
          %v863 = vsub.f32 %v735, %v799
          %v864 = vsub.f32 %v736, %v800
          %v865 = vsub.f32 %v737, %v801
          %v866 = vsub.f32 %v738, %v802
          %v867 = vsub.f32 %v739, %v803
          %v868 = vsub.f32 %v740, %v804
          %v869 = vsub.f32 %v741, %v805
          %v870 = vsub.f32 %v742, %v806
          %v871 = vsub.f32 %v743, %v807
          %v872 = vsub.f32 %v744, %v808
          %v873 = vsub.f32 %v745, %v809
          %v874 = vsub.f32 %v746, %v810
          %v875 = vsub.f32 %v747, %v811
          %v876 = vsub.f32 %v748, %v812
          %v877 = vsub.f32 %v749, %v813
          %v878 = vsub.f32 %v750, %v814
          %v879 = vsub.f32 %v751, %v815
          %v880 = vsub.f32 %v752, %v816
          %v881 = vsub.f32 %v753, %v817
          %v882 = vsub.f32 %v754, %v818
          %v883 = vsub.f32 %v755, %v819
          %v884 = vsub.f32 %v756, %v820
          %v885 = vsub.f32 %v757, %v821
          %v886 = vsub.f32 %v758, %v822
          %v887 = vsub.f32 %v759, %v823
          %v888 = vsub.f32 %v760, %v824
          %v889 = vsub.f32 %v761, %v825
          %v890 = vsub.f32 %v762, %v826
          %v891 = vsub.f32 %v763, %v827
          %v892 = vsub.f32 %v764, %v828
          %v893 = vsub.f32 %v765, %v829
          %v894 = vsub.f32 %v766, %v830
          %v895 = vsub.f32 %v767, %v831
          %v896 = vmax.f32 %v832, 0.0
          %v897 = vmax.f32 %v833, 0.0
          %v898 = vmax.f32 %v834, 0.0
          %v899 = vmax.f32 %v835, 0.0
          %v900 = vmax.f32 %v836, 0.0
          %v901 = vmax.f32 %v837, 0.0
          %v902 = vmax.f32 %v838, 0.0
          %v903 = vmax.f32 %v839, 0.0
          %v904 = vmax.f32 %v840, 0.0
          %v905 = vmax.f32 %v841, 0.0
          %v906 = vmax.f32 %v842, 0.0
          %v907 = vmax.f32 %v843, 0.0
          %v908 = vmax.f32 %v844, 0.0
          %v909 = vmax.f32 %v845, 0.0
          %v910 = vmax.f32 %v846, 0.0
          %v911 = vmax.f32 %v847, 0.0
          %v912 = vmax.f32 %v848, 0.0
          %v913 = vmax.f32 %v849, 0.0
          %v914 = vmax.f32 %v850, 0.0
          %v915 = vmax.f32 %v851, 0.0
          %v916 = vmax.f32 %v852, 0.0
          %v917 = vmax.f32 %v853, 0.0
          %v918 = vmax.f32 %v854, 0.0
          %v919 = vmax.f32 %v855, 0.0
          %v920 = vmax.f32 %v856, 0.0
          %v921 = vmax.f32 %v857, 0.0
          %v922 = vmax.f32 %v858, 0.0
          %v923 = vmax.f32 %v859, 0.0
          %v924 = vmax.f32 %v860, 0.0
          %v925 = vmax.f32 %v861, 0.0
          %v926 = vmax.f32 %v862, 0.0
          %v927 = vmax.f32 %v863, 0.0
          %v928 = vmax.f32 %v864, 0.0
          %v929 = vmax.f32 %v865, 0.0
          %v930 = vmax.f32 %v866, 0.0
          %v931 = vmax.f32 %v867, 0.0
          %v932 = vmax.f32 %v868, 0.0
          %v933 = vmax.f32 %v869, 0.0
          %v934 = vmax.f32 %v870, 0.0
          %v935 = vmax.f32 %v871, 0.0
          %v936 = vmax.f32 %v872, 0.0
          %v937 = vmax.f32 %v873, 0.0
          %v938 = vmax.f32 %v874, 0.0
          %v939 = vmax.f32 %v875, 0.0
          %v940 = vmax.f32 %v876, 0.0
          %v941 = vmax.f32 %v877, 0.0
          %v942 = vmax.f32 %v878, 0.0
          %v943 = vmax.f32 %v879, 0.0
          %v944 = vmax.f32 %v880, 0.0
          %v945 = vmax.f32 %v881, 0.0
          %v946 = vmax.f32 %v882, 0.0
          %v947 = vmax.f32 %v883, 0.0
          %v948 = vmax.f32 %v884, 0.0
          %v949 = vmax.f32 %v885, 0.0
          %v950 = vmax.f32 %v886, 0.0
          %v951 = vmax.f32 %v887, 0.0
          %v952 = vmax.f32 %v888, 0.0
          %v953 = vmax.f32 %v889, 0.0
          %v954 = vmax.f32 %v890, 0.0
          %v955 = vmax.f32 %v891, 0.0
          %v956 = vmax.f32 %v892, 0.0
          %v957 = vmax.f32 %v893, 0.0
          %v958 = vmax.f32 %v894, 0.0
          %v959 = vmax.f32 %v895, 0.0
          %v960 = vsub.f32 %v249, %v448
          %v961 = vsub.f32 %v250, %v449
          %v962 = vsub.f32 %v251, %v450
          %v963 = vsub.f32 %v252, %v451
          %v964 = vsub.f32 %v253, %v452
          %v965 = vsub.f32 %v254, %v453
          %v966 = vsub.f32 %v255, %v454
          %v967 = vsub.f32 %v256, %v455
          %v968 = vsub.f32 %v257, %v456
          %v969 = vsub.f32 %v258, %v457
          %v970 = vsub.f32 %v259, %v458
          %v971 = vsub.f32 %v260, %v459
          %v972 = vsub.f32 %v261, %v460
          %v973 = vsub.f32 %v262, %v461
          %v974 = vsub.f32 %v263, %v462
          %v975 = vsub.f32 %v264, %v463
          %v976 = vsub.f32 %v265, %v464
          %v977 = vsub.f32 %v266, %v465
          %v978 = vsub.f32 %v267, %v466
          %v979 = vsub.f32 %v268, %v467
          %v980 = vsub.f32 %v269, %v468
          %v981 = vsub.f32 %v270, %v469
          %v982 = vsub.f32 %v271, %v470
          %v983 = vsub.f32 %v272, %v471
          %v984 = vsub.f32 %v273, %v472
          %v985 = vsub.f32 %v274, %v473
          %v986 = vsub.f32 %v275, %v474
          %v987 = vsub.f32 %v276, %v475
          %v988 = vsub.f32 %v277, %v476
          %v989 = vsub.f32 %v278, %v477
          %v990 = vsub.f32 %v279, %v478
          %v991 = vsub.f32 %v280, %v479
          %v992 = vsub.f32 %v281, %v480
          %v993 = vsub.f32 %v282, %v481
          %v994 = vsub.f32 %v283, %v482
          %v995 = vsub.f32 %v284, %v483
          %v996 = vsub.f32 %v285, %v484
          %v997 = vsub.f32 %v286, %v485
          %v998 = vsub.f32 %v287, %v486
          %v999 = vsub.f32 %v288, %v487
          %v1000 = vsub.f32 %v289, %v488
          %v1001 = vsub.f32 %v290, %v489
          %v1002 = vsub.f32 %v291, %v490
          %v1003 = vsub.f32 %v292, %v491
          %v1004 = vsub.f32 %v293, %v492
          %v1005 = vsub.f32 %v294, %v493
          %v1006 = vsub.f32 %v295, %v494
          %v1007 = vsub.f32 %v296, %v495
          %v1008 = vsub.f32 %v297, %v496
          %v1009 = vsub.f32 %v298, %v497
          %v1010 = vsub.f32 %v299, %v498
          %v1011 = vsub.f32 %v300, %v499
          %v1012 = vsub.f32 %v301, %v500
          %v1013 = vsub.f32 %v302, %v501
          %v1014 = vsub.f32 %v303, %v502
          %v1015 = vsub.f32 %v304, %v503
          %v1016 = vsub.f32 %v305, %v504
          %v1017 = vsub.f32 %v306, %v505
          %v1018 = vsub.f32 %v307, %v506
          %v1019 = vsub.f32 %v308, %v507
          %v1020 = vsub.f32 %v309, %v508
          %v1021 = vsub.f32 %v310, %v509
          %v1022 = vsub.f32 %v311, %v510
          %v1023 = vsub.f32 %v312, %v511
          %v1024 = vadd.f32 %v896, 1e-05
          %v1025 = vadd.f32 %v897, 1e-05
          %v1026 = vadd.f32 %v898, 1e-05
          %v1027 = vadd.f32 %v899, 1e-05
          %v1028 = vadd.f32 %v900, 1e-05
          %v1029 = vadd.f32 %v901, 1e-05
          %v1030 = vadd.f32 %v902, 1e-05
          %v1031 = vadd.f32 %v903, 1e-05
          %v1032 = vadd.f32 %v904, 1e-05
          %v1033 = vadd.f32 %v905, 1e-05
          %v1034 = vadd.f32 %v906, 1e-05
          %v1035 = vadd.f32 %v907, 1e-05
          %v1036 = vadd.f32 %v908, 1e-05
          %v1037 = vadd.f32 %v909, 1e-05
          %v1038 = vadd.f32 %v910, 1e-05
          %v1039 = vadd.f32 %v911, 1e-05
          %v1040 = vadd.f32 %v912, 1e-05
          %v1041 = vadd.f32 %v913, 1e-05
          %v1042 = vadd.f32 %v914, 1e-05
          %v1043 = vadd.f32 %v915, 1e-05
          %v1044 = vadd.f32 %v916, 1e-05
          %v1045 = vadd.f32 %v917, 1e-05
          %v1046 = vadd.f32 %v918, 1e-05
          %v1047 = vadd.f32 %v919, 1e-05
          %v1048 = vadd.f32 %v920, 1e-05
          %v1049 = vadd.f32 %v921, 1e-05
          %v1050 = vadd.f32 %v922, 1e-05
          %v1051 = vadd.f32 %v923, 1e-05
          %v1052 = vadd.f32 %v924, 1e-05
          %v1053 = vadd.f32 %v925, 1e-05
          %v1054 = vadd.f32 %v926, 1e-05
          %v1055 = vadd.f32 %v927, 1e-05
          %v1056 = vadd.f32 %v928, 1e-05
          %v1057 = vadd.f32 %v929, 1e-05
          %v1058 = vadd.f32 %v930, 1e-05
          %v1059 = vadd.f32 %v931, 1e-05
          %v1060 = vadd.f32 %v932, 1e-05
          %v1061 = vadd.f32 %v933, 1e-05
          %v1062 = vadd.f32 %v934, 1e-05
          %v1063 = vadd.f32 %v935, 1e-05
          %v1064 = vadd.f32 %v936, 1e-05
          %v1065 = vadd.f32 %v937, 1e-05
          %v1066 = vadd.f32 %v938, 1e-05
          %v1067 = vadd.f32 %v939, 1e-05
          %v1068 = vadd.f32 %v940, 1e-05
          %v1069 = vadd.f32 %v941, 1e-05
          %v1070 = vadd.f32 %v942, 1e-05
          %v1071 = vadd.f32 %v943, 1e-05
          %v1072 = vadd.f32 %v944, 1e-05
          %v1073 = vadd.f32 %v945, 1e-05
          %v1074 = vadd.f32 %v946, 1e-05
          %v1075 = vadd.f32 %v947, 1e-05
          %v1076 = vadd.f32 %v948, 1e-05
          %v1077 = vadd.f32 %v949, 1e-05
          %v1078 = vadd.f32 %v950, 1e-05
          %v1079 = vadd.f32 %v951, 1e-05
          %v1080 = vadd.f32 %v952, 1e-05
          %v1081 = vadd.f32 %v953, 1e-05
          %v1082 = vadd.f32 %v954, 1e-05
          %v1083 = vadd.f32 %v955, 1e-05
          %v1084 = vadd.f32 %v956, 1e-05
          %v1085 = vadd.f32 %v957, 1e-05
          %v1086 = vadd.f32 %v958, 1e-05
          %v1087 = vadd.f32 %v959, 1e-05
          %v1088 = vrsqrt.pop %v1024
          %v1089 = vmul.f32 %v1088, %v1024
          %v1090 = vmul.f32 %v1089, %v1088
          %v1091 = vmul.f32 0.5, %v1090
          %v1092 = vsub.f32 1.5, %v1091
          %v1093 = vmul.f32 %v1088, %v1092
          %vm1094 = vweird.f32 %v1024
          %vm1095 = vweird.f32 %v1088
          %vm1096 = vmor %vm1094, %vm1095
          %v1097 = vsel %vm1096, %v1088, %v1093
          %v1098 = vrsqrt.pop %v1025
          %v1099 = vmul.f32 %v1098, %v1025
          %v1100 = vmul.f32 %v1099, %v1098
          %v1101 = vmul.f32 0.5, %v1100
          %v1102 = vsub.f32 1.5, %v1101
          %v1103 = vmul.f32 %v1098, %v1102
          %vm1104 = vweird.f32 %v1025
          %vm1105 = vweird.f32 %v1098
          %vm1106 = vmor %vm1104, %vm1105
          %v1107 = vsel %vm1106, %v1098, %v1103
          %v1108 = vrsqrt.pop %v1026
          %v1109 = vmul.f32 %v1108, %v1026
          %v1110 = vmul.f32 %v1109, %v1108
          %v1111 = vmul.f32 0.5, %v1110
          %v1112 = vsub.f32 1.5, %v1111
          %v1113 = vmul.f32 %v1108, %v1112
          %vm1114 = vweird.f32 %v1026
          %vm1115 = vweird.f32 %v1108
          %vm1116 = vmor %vm1114, %vm1115
          %v1117 = vsel %vm1116, %v1108, %v1113
          %v1118 = vrsqrt.pop %v1027
          %v1119 = vmul.f32 %v1118, %v1027
          %v1120 = vmul.f32 %v1119, %v1118
          %v1121 = vmul.f32 0.5, %v1120
          %v1122 = vsub.f32 1.5, %v1121
          %v1123 = vmul.f32 %v1118, %v1122
          %vm1124 = vweird.f32 %v1027
          %vm1125 = vweird.f32 %v1118
          %vm1126 = vmor %vm1124, %vm1125
          %v1127 = vsel %vm1126, %v1118, %v1123
          %v1128 = vrsqrt.pop %v1028
          %v1129 = vmul.f32 %v1128, %v1028
          %v1130 = vmul.f32 %v1129, %v1128
          %v1131 = vmul.f32 0.5, %v1130
          %v1132 = vsub.f32 1.5, %v1131
          %v1133 = vmul.f32 %v1128, %v1132
          %vm1134 = vweird.f32 %v1028
          %vm1135 = vweird.f32 %v1128
          %vm1136 = vmor %vm1134, %vm1135
          %v1137 = vsel %vm1136, %v1128, %v1133
          %v1138 = vrsqrt.pop %v1029
          %v1139 = vmul.f32 %v1138, %v1029
          %v1140 = vmul.f32 %v1139, %v1138
          %v1141 = vmul.f32 0.5, %v1140
          %v1142 = vsub.f32 1.5, %v1141
          %v1143 = vmul.f32 %v1138, %v1142
          %vm1144 = vweird.f32 %v1029
          %vm1145 = vweird.f32 %v1138
          %vm1146 = vmor %vm1144, %vm1145
          %v1147 = vsel %vm1146, %v1138, %v1143
          %v1148 = vrsqrt.pop %v1030
          %v1149 = vmul.f32 %v1148, %v1030
          %v1150 = vmul.f32 %v1149, %v1148
          %v1151 = vmul.f32 0.5, %v1150
          %v1152 = vsub.f32 1.5, %v1151
          %v1153 = vmul.f32 %v1148, %v1152
          %vm1154 = vweird.f32 %v1030
          %vm1155 = vweird.f32 %v1148
          %vm1156 = vmor %vm1154, %vm1155
          %v1157 = vsel %vm1156, %v1148, %v1153
          %v1158 = vrsqrt.pop %v1031
          %v1159 = vmul.f32 %v1158, %v1031
          %v1160 = vmul.f32 %v1159, %v1158
          %v1161 = vmul.f32 0.5, %v1160
          %v1162 = vsub.f32 1.5, %v1161
          %v1163 = vmul.f32 %v1158, %v1162
          %vm1164 = vweird.f32 %v1031
          %vm1165 = vweird.f32 %v1158
          %vm1166 = vmor %vm1164, %vm1165
          %v1167 = vsel %vm1166, %v1158, %v1163
          %v1168 = vrsqrt.pop %v1032
          %v1169 = vmul.f32 %v1168, %v1032
          %v1170 = vmul.f32 %v1169, %v1168
          %v1171 = vmul.f32 0.5, %v1170
          %v1172 = vsub.f32 1.5, %v1171
          %v1173 = vmul.f32 %v1168, %v1172
          %vm1174 = vweird.f32 %v1032
          %vm1175 = vweird.f32 %v1168
          %vm1176 = vmor %vm1174, %vm1175
          %v1177 = vsel %vm1176, %v1168, %v1173
          %v1178 = vrsqrt.pop %v1033
          %v1179 = vmul.f32 %v1178, %v1033
          %v1180 = vmul.f32 %v1179, %v1178
          %v1181 = vmul.f32 0.5, %v1180
          %v1182 = vsub.f32 1.5, %v1181
          %v1183 = vmul.f32 %v1178, %v1182
          %vm1184 = vweird.f32 %v1033
          %vm1185 = vweird.f32 %v1178
          %vm1186 = vmor %vm1184, %vm1185
          %v1187 = vsel %vm1186, %v1178, %v1183
          %v1188 = vrsqrt.pop %v1034
          %v1189 = vmul.f32 %v1188, %v1034
          %v1190 = vmul.f32 %v1189, %v1188
          %v1191 = vmul.f32 0.5, %v1190
          %v1192 = vsub.f32 1.5, %v1191
          %v1193 = vmul.f32 %v1188, %v1192
          %vm1194 = vweird.f32 %v1034
          %vm1195 = vweird.f32 %v1188
          %vm1196 = vmor %vm1194, %vm1195
          %v1197 = vsel %vm1196, %v1188, %v1193
          %v1198 = vrsqrt.pop %v1035
          %v1199 = vmul.f32 %v1198, %v1035
          %v1200 = vmul.f32 %v1199, %v1198
          %v1201 = vmul.f32 0.5, %v1200
          %v1202 = vsub.f32 1.5, %v1201
          %v1203 = vmul.f32 %v1198, %v1202
          %vm1204 = vweird.f32 %v1035
          %vm1205 = vweird.f32 %v1198
          %vm1206 = vmor %vm1204, %vm1205
          %v1207 = vsel %vm1206, %v1198, %v1203
          %v1208 = vrsqrt.pop %v1036
          %v1209 = vmul.f32 %v1208, %v1036
          %v1210 = vmul.f32 %v1209, %v1208
          %v1211 = vmul.f32 0.5, %v1210
          %v1212 = vsub.f32 1.5, %v1211
          %v1213 = vmul.f32 %v1208, %v1212
          %vm1214 = vweird.f32 %v1036
          %vm1215 = vweird.f32 %v1208
          %vm1216 = vmor %vm1214, %vm1215
          %v1217 = vsel %vm1216, %v1208, %v1213
          %v1218 = vrsqrt.pop %v1037
          %v1219 = vmul.f32 %v1218, %v1037
          %v1220 = vmul.f32 %v1219, %v1218
          %v1221 = vmul.f32 0.5, %v1220
          %v1222 = vsub.f32 1.5, %v1221
          %v1223 = vmul.f32 %v1218, %v1222
          %vm1224 = vweird.f32 %v1037
          %vm1225 = vweird.f32 %v1218
          %vm1226 = vmor %vm1224, %vm1225
          %v1227 = vsel %vm1226, %v1218, %v1223
          %v1228 = vrsqrt.pop %v1038
          %v1229 = vmul.f32 %v1228, %v1038
          %v1230 = vmul.f32 %v1229, %v1228
          %v1231 = vmul.f32 0.5, %v1230
          %v1232 = vsub.f32 1.5, %v1231
          %v1233 = vmul.f32 %v1228, %v1232
          %vm1234 = vweird.f32 %v1038
          %vm1235 = vweird.f32 %v1228
          %vm1236 = vmor %vm1234, %vm1235
          %v1237 = vsel %vm1236, %v1228, %v1233
          %v1238 = vrsqrt.pop %v1039
          %v1239 = vmul.f32 %v1238, %v1039
          %v1240 = vmul.f32 %v1239, %v1238
          %v1241 = vmul.f32 0.5, %v1240
          %v1242 = vsub.f32 1.5, %v1241
          %v1243 = vmul.f32 %v1238, %v1242
          %vm1244 = vweird.f32 %v1039
          %vm1245 = vweird.f32 %v1238
          %vm1246 = vmor %vm1244, %vm1245
          %v1247 = vsel %vm1246, %v1238, %v1243
          %v1248 = vrsqrt.pop %v1040
          %v1249 = vmul.f32 %v1248, %v1040
          %v1250 = vmul.f32 %v1249, %v1248
          %v1251 = vmul.f32 0.5, %v1250
          %v1252 = vsub.f32 1.5, %v1251
          %v1253 = vmul.f32 %v1248, %v1252
          %vm1254 = vweird.f32 %v1040
          %vm1255 = vweird.f32 %v1248
          %vm1256 = vmor %vm1254, %vm1255
          %v1257 = vsel %vm1256, %v1248, %v1253
          %v1258 = vrsqrt.pop %v1041
          %v1259 = vmul.f32 %v1258, %v1041
          %v1260 = vmul.f32 %v1259, %v1258
          %v1261 = vmul.f32 0.5, %v1260
          %v1262 = vsub.f32 1.5, %v1261
          %v1263 = vmul.f32 %v1258, %v1262
          %vm1264 = vweird.f32 %v1041
          %vm1265 = vweird.f32 %v1258
          %vm1266 = vmor %vm1264, %vm1265
          %v1267 = vsel %vm1266, %v1258, %v1263
          %v1268 = vrsqrt.pop %v1042
          %v1269 = vmul.f32 %v1268, %v1042
          %v1270 = vmul.f32 %v1269, %v1268
          %v1271 = vmul.f32 0.5, %v1270
          %v1272 = vsub.f32 1.5, %v1271
          %v1273 = vmul.f32 %v1268, %v1272
          %vm1274 = vweird.f32 %v1042
          %vm1275 = vweird.f32 %v1268
          %vm1276 = vmor %vm1274, %vm1275
          %v1277 = vsel %vm1276, %v1268, %v1273
          %v1278 = vrsqrt.pop %v1043
          %v1279 = vmul.f32 %v1278, %v1043
          %v1280 = vmul.f32 %v1279, %v1278
          %v1281 = vmul.f32 0.5, %v1280
          %v1282 = vsub.f32 1.5, %v1281
          %v1283 = vmul.f32 %v1278, %v1282
          %vm1284 = vweird.f32 %v1043
          %vm1285 = vweird.f32 %v1278
          %vm1286 = vmor %vm1284, %vm1285
          %v1287 = vsel %vm1286, %v1278, %v1283
          %v1288 = vrsqrt.pop %v1044
          %v1289 = vmul.f32 %v1288, %v1044
          %v1290 = vmul.f32 %v1289, %v1288
          %v1291 = vmul.f32 0.5, %v1290
          %v1292 = vsub.f32 1.5, %v1291
          %v1293 = vmul.f32 %v1288, %v1292
          %vm1294 = vweird.f32 %v1044
          %vm1295 = vweird.f32 %v1288
          %vm1296 = vmor %vm1294, %vm1295
          %v1297 = vsel %vm1296, %v1288, %v1293
          %v1298 = vrsqrt.pop %v1045
          %v1299 = vmul.f32 %v1298, %v1045
          %v1300 = vmul.f32 %v1299, %v1298
          %v1301 = vmul.f32 0.5, %v1300
          %v1302 = vsub.f32 1.5, %v1301
          %v1303 = vmul.f32 %v1298, %v1302
          %vm1304 = vweird.f32 %v1045
          %vm1305 = vweird.f32 %v1298
          %vm1306 = vmor %vm1304, %vm1305
          %v1307 = vsel %vm1306, %v1298, %v1303
          %v1308 = vrsqrt.pop %v1046
          %v1309 = vmul.f32 %v1308, %v1046
          %v1310 = vmul.f32 %v1309, %v1308
          %v1311 = vmul.f32 0.5, %v1310
          %v1312 = vsub.f32 1.5, %v1311
          %v1313 = vmul.f32 %v1308, %v1312
          %vm1314 = vweird.f32 %v1046
          %vm1315 = vweird.f32 %v1308
          %vm1316 = vmor %vm1314, %vm1315
          %v1317 = vsel %vm1316, %v1308, %v1313
          %v1318 = vrsqrt.pop %v1047
          %v1319 = vmul.f32 %v1318, %v1047
          %v1320 = vmul.f32 %v1319, %v1318
          %v1321 = vmul.f32 0.5, %v1320
          %v1322 = vsub.f32 1.5, %v1321
          %v1323 = vmul.f32 %v1318, %v1322
          %vm1324 = vweird.f32 %v1047
          %vm1325 = vweird.f32 %v1318
          %vm1326 = vmor %vm1324, %vm1325
          %v1327 = vsel %vm1326, %v1318, %v1323
          %v1328 = vrsqrt.pop %v1048
          %v1329 = vmul.f32 %v1328, %v1048
          %v1330 = vmul.f32 %v1329, %v1328
          %v1331 = vmul.f32 0.5, %v1330
          %v1332 = vsub.f32 1.5, %v1331
          %v1333 = vmul.f32 %v1328, %v1332
          %vm1334 = vweird.f32 %v1048
          %vm1335 = vweird.f32 %v1328
          %vm1336 = vmor %vm1334, %vm1335
          %v1337 = vsel %vm1336, %v1328, %v1333
          %v1338 = vrsqrt.pop %v1049
          %v1339 = vmul.f32 %v1338, %v1049
          %v1340 = vmul.f32 %v1339, %v1338
          %v1341 = vmul.f32 0.5, %v1340
          %v1342 = vsub.f32 1.5, %v1341
          %v1343 = vmul.f32 %v1338, %v1342
          %vm1344 = vweird.f32 %v1049
          %vm1345 = vweird.f32 %v1338
          %vm1346 = vmor %vm1344, %vm1345
          %v1347 = vsel %vm1346, %v1338, %v1343
          %v1348 = vrsqrt.pop %v1050
          %v1349 = vmul.f32 %v1348, %v1050
          %v1350 = vmul.f32 %v1349, %v1348
          %v1351 = vmul.f32 0.5, %v1350
          %v1352 = vsub.f32 1.5, %v1351
          %v1353 = vmul.f32 %v1348, %v1352
          %vm1354 = vweird.f32 %v1050
          %vm1355 = vweird.f32 %v1348
          %vm1356 = vmor %vm1354, %vm1355
          %v1357 = vsel %vm1356, %v1348, %v1353
          %v1358 = vrsqrt.pop %v1051
          %v1359 = vmul.f32 %v1358, %v1051
          %v1360 = vmul.f32 %v1359, %v1358
          %v1361 = vmul.f32 0.5, %v1360
          %v1362 = vsub.f32 1.5, %v1361
          %v1363 = vmul.f32 %v1358, %v1362
          %vm1364 = vweird.f32 %v1051
          %vm1365 = vweird.f32 %v1358
          %vm1366 = vmor %vm1364, %vm1365
          %v1367 = vsel %vm1366, %v1358, %v1363
          %v1368 = vrsqrt.pop %v1052
          %v1369 = vmul.f32 %v1368, %v1052
          %v1370 = vmul.f32 %v1369, %v1368
          %v1371 = vmul.f32 0.5, %v1370
          %v1372 = vsub.f32 1.5, %v1371
          %v1373 = vmul.f32 %v1368, %v1372
          %vm1374 = vweird.f32 %v1052
          %vm1375 = vweird.f32 %v1368
          %vm1376 = vmor %vm1374, %vm1375
          %v1377 = vsel %vm1376, %v1368, %v1373
          %v1378 = vrsqrt.pop %v1053
          %v1379 = vmul.f32 %v1378, %v1053
          %v1380 = vmul.f32 %v1379, %v1378
          %v1381 = vmul.f32 0.5, %v1380
          %v1382 = vsub.f32 1.5, %v1381
          %v1383 = vmul.f32 %v1378, %v1382
          %vm1384 = vweird.f32 %v1053
          %vm1385 = vweird.f32 %v1378
          %vm1386 = vmor %vm1384, %vm1385
          %v1387 = vsel %vm1386, %v1378, %v1383
          %v1388 = vrsqrt.pop %v1054
          %v1389 = vmul.f32 %v1388, %v1054
          %v1390 = vmul.f32 %v1389, %v1388
          %v1391 = vmul.f32 0.5, %v1390
          %v1392 = vsub.f32 1.5, %v1391
          %v1393 = vmul.f32 %v1388, %v1392
          %vm1394 = vweird.f32 %v1054
          %vm1395 = vweird.f32 %v1388
          %vm1396 = vmor %vm1394, %vm1395
          %v1397 = vsel %vm1396, %v1388, %v1393
          %v1398 = vrsqrt.pop %v1055
          %v1399 = vmul.f32 %v1398, %v1055
          %v1400 = vmul.f32 %v1399, %v1398
          %v1401 = vmul.f32 0.5, %v1400
          %v1402 = vsub.f32 1.5, %v1401
          %v1403 = vmul.f32 %v1398, %v1402
          %vm1404 = vweird.f32 %v1055
          %vm1405 = vweird.f32 %v1398
          %vm1406 = vmor %vm1404, %vm1405
          %v1407 = vsel %vm1406, %v1398, %v1403
          %v1408 = vrsqrt.pop %v1056
          %v1409 = vmul.f32 %v1408, %v1056
          %v1410 = vmul.f32 %v1409, %v1408
          %v1411 = vmul.f32 0.5, %v1410
          %v1412 = vsub.f32 1.5, %v1411
          %v1413 = vmul.f32 %v1408, %v1412
          %vm1414 = vweird.f32 %v1056
          %vm1415 = vweird.f32 %v1408
          %vm1416 = vmor %vm1414, %vm1415
          %v1417 = vsel %vm1416, %v1408, %v1413
          %v1418 = vrsqrt.pop %v1057
          %v1419 = vmul.f32 %v1418, %v1057
          %v1420 = vmul.f32 %v1419, %v1418
          %v1421 = vmul.f32 0.5, %v1420
          %v1422 = vsub.f32 1.5, %v1421
          %v1423 = vmul.f32 %v1418, %v1422
          %vm1424 = vweird.f32 %v1057
          %vm1425 = vweird.f32 %v1418
          %vm1426 = vmor %vm1424, %vm1425
          %v1427 = vsel %vm1426, %v1418, %v1423
          %v1428 = vrsqrt.pop %v1058
          %v1429 = vmul.f32 %v1428, %v1058
          %v1430 = vmul.f32 %v1429, %v1428
          %v1431 = vmul.f32 0.5, %v1430
          %v1432 = vsub.f32 1.5, %v1431
          %v1433 = vmul.f32 %v1428, %v1432
          %vm1434 = vweird.f32 %v1058
          %vm1435 = vweird.f32 %v1428
          %vm1436 = vmor %vm1434, %vm1435
          %v1437 = vsel %vm1436, %v1428, %v1433
          %v1438 = vrsqrt.pop %v1059
          %v1439 = vmul.f32 %v1438, %v1059
          %v1440 = vmul.f32 %v1439, %v1438
          %v1441 = vmul.f32 0.5, %v1440
          %v1442 = vsub.f32 1.5, %v1441
          %v1443 = vmul.f32 %v1438, %v1442
          %vm1444 = vweird.f32 %v1059
          %vm1445 = vweird.f32 %v1438
          %vm1446 = vmor %vm1444, %vm1445
          %v1447 = vsel %vm1446, %v1438, %v1443
          %v1448 = vrsqrt.pop %v1060
          %v1449 = vmul.f32 %v1448, %v1060
          %v1450 = vmul.f32 %v1449, %v1448
          %v1451 = vmul.f32 0.5, %v1450
          %v1452 = vsub.f32 1.5, %v1451
          %v1453 = vmul.f32 %v1448, %v1452
          %vm1454 = vweird.f32 %v1060
          %vm1455 = vweird.f32 %v1448
          %vm1456 = vmor %vm1454, %vm1455
          %v1457 = vsel %vm1456, %v1448, %v1453
          %v1458 = vrsqrt.pop %v1061
          %v1459 = vmul.f32 %v1458, %v1061
          %v1460 = vmul.f32 %v1459, %v1458
          %v1461 = vmul.f32 0.5, %v1460
          %v1462 = vsub.f32 1.5, %v1461
          %v1463 = vmul.f32 %v1458, %v1462
          %vm1464 = vweird.f32 %v1061
          %vm1465 = vweird.f32 %v1458
          %vm1466 = vmor %vm1464, %vm1465
          %v1467 = vsel %vm1466, %v1458, %v1463
          %v1468 = vrsqrt.pop %v1062
          %v1469 = vmul.f32 %v1468, %v1062
          %v1470 = vmul.f32 %v1469, %v1468
          %v1471 = vmul.f32 0.5, %v1470
          %v1472 = vsub.f32 1.5, %v1471
          %v1473 = vmul.f32 %v1468, %v1472
          %vm1474 = vweird.f32 %v1062
          %vm1475 = vweird.f32 %v1468
          %vm1476 = vmor %vm1474, %vm1475
          %v1477 = vsel %vm1476, %v1468, %v1473
          %v1478 = vrsqrt.pop %v1063
          %v1479 = vmul.f32 %v1478, %v1063
          %v1480 = vmul.f32 %v1479, %v1478
          %v1481 = vmul.f32 0.5, %v1480
          %v1482 = vsub.f32 1.5, %v1481
          %v1483 = vmul.f32 %v1478, %v1482
          %vm1484 = vweird.f32 %v1063
          %vm1485 = vweird.f32 %v1478
          %vm1486 = vmor %vm1484, %vm1485
          %v1487 = vsel %vm1486, %v1478, %v1483
          %v1488 = vrsqrt.pop %v1064
          %v1489 = vmul.f32 %v1488, %v1064
          %v1490 = vmul.f32 %v1489, %v1488
          %v1491 = vmul.f32 0.5, %v1490
          %v1492 = vsub.f32 1.5, %v1491
          %v1493 = vmul.f32 %v1488, %v1492
          %vm1494 = vweird.f32 %v1064
          %vm1495 = vweird.f32 %v1488
          %vm1496 = vmor %vm1494, %vm1495
          %v1497 = vsel %vm1496, %v1488, %v1493
          %v1498 = vrsqrt.pop %v1065
          %v1499 = vmul.f32 %v1498, %v1065
          %v1500 = vmul.f32 %v1499, %v1498
          %v1501 = vmul.f32 0.5, %v1500
          %v1502 = vsub.f32 1.5, %v1501
          %v1503 = vmul.f32 %v1498, %v1502
          %vm1504 = vweird.f32 %v1065
          %vm1505 = vweird.f32 %v1498
          %vm1506 = vmor %vm1504, %vm1505
          %v1507 = vsel %vm1506, %v1498, %v1503
          %v1508 = vrsqrt.pop %v1066
          %v1509 = vmul.f32 %v1508, %v1066
          %v1510 = vmul.f32 %v1509, %v1508
          %v1511 = vmul.f32 0.5, %v1510
          %v1512 = vsub.f32 1.5, %v1511
          %v1513 = vmul.f32 %v1508, %v1512
          %vm1514 = vweird.f32 %v1066
          %vm1515 = vweird.f32 %v1508
          %vm1516 = vmor %vm1514, %vm1515
          %v1517 = vsel %vm1516, %v1508, %v1513
          %v1518 = vrsqrt.pop %v1067
          %v1519 = vmul.f32 %v1518, %v1067
          %v1520 = vmul.f32 %v1519, %v1518
          %v1521 = vmul.f32 0.5, %v1520
          %v1522 = vsub.f32 1.5, %v1521
          %v1523 = vmul.f32 %v1518, %v1522
          %vm1524 = vweird.f32 %v1067
          %vm1525 = vweird.f32 %v1518
          %vm1526 = vmor %vm1524, %vm1525
          %v1527 = vsel %vm1526, %v1518, %v1523
          %v1528 = vrsqrt.pop %v1068
          %v1529 = vmul.f32 %v1528, %v1068
          %v1530 = vmul.f32 %v1529, %v1528
          %v1531 = vmul.f32 0.5, %v1530
          %v1532 = vsub.f32 1.5, %v1531
          %v1533 = vmul.f32 %v1528, %v1532
          %vm1534 = vweird.f32 %v1068
          %vm1535 = vweird.f32 %v1528
          %vm1536 = vmor %vm1534, %vm1535
          %v1537 = vsel %vm1536, %v1528, %v1533
          %v1538 = vrsqrt.pop %v1069
          %v1539 = vmul.f32 %v1538, %v1069
          %v1540 = vmul.f32 %v1539, %v1538
          %v1541 = vmul.f32 0.5, %v1540
          %v1542 = vsub.f32 1.5, %v1541
          %v1543 = vmul.f32 %v1538, %v1542
          %vm1544 = vweird.f32 %v1069
          %vm1545 = vweird.f32 %v1538
          %vm1546 = vmor %vm1544, %vm1545
          %v1547 = vsel %vm1546, %v1538, %v1543
          %v1548 = vrsqrt.pop %v1070
          %v1549 = vmul.f32 %v1548, %v1070
          %v1550 = vmul.f32 %v1549, %v1548
          %v1551 = vmul.f32 0.5, %v1550
          %v1552 = vsub.f32 1.5, %v1551
          %v1553 = vmul.f32 %v1548, %v1552
          %vm1554 = vweird.f32 %v1070
          %vm1555 = vweird.f32 %v1548
          %vm1556 = vmor %vm1554, %vm1555
          %v1557 = vsel %vm1556, %v1548, %v1553
          %v1558 = vrsqrt.pop %v1071
          %v1559 = vmul.f32 %v1558, %v1071
          %v1560 = vmul.f32 %v1559, %v1558
          %v1561 = vmul.f32 0.5, %v1560
          %v1562 = vsub.f32 1.5, %v1561
          %v1563 = vmul.f32 %v1558, %v1562
          %vm1564 = vweird.f32 %v1071
          %vm1565 = vweird.f32 %v1558
          %vm1566 = vmor %vm1564, %vm1565
          %v1567 = vsel %vm1566, %v1558, %v1563
          %v1568 = vrsqrt.pop %v1072
          %v1569 = vmul.f32 %v1568, %v1072
          %v1570 = vmul.f32 %v1569, %v1568
          %v1571 = vmul.f32 0.5, %v1570
          %v1572 = vsub.f32 1.5, %v1571
          %v1573 = vmul.f32 %v1568, %v1572
          %vm1574 = vweird.f32 %v1072
          %vm1575 = vweird.f32 %v1568
          %vm1576 = vmor %vm1574, %vm1575
          %v1577 = vsel %vm1576, %v1568, %v1573
          %v1578 = vrsqrt.pop %v1073
          %v1579 = vmul.f32 %v1578, %v1073
          %v1580 = vmul.f32 %v1579, %v1578
          %v1581 = vmul.f32 0.5, %v1580
          %v1582 = vsub.f32 1.5, %v1581
          %v1583 = vmul.f32 %v1578, %v1582
          %vm1584 = vweird.f32 %v1073
          %vm1585 = vweird.f32 %v1578
          %vm1586 = vmor %vm1584, %vm1585
          %v1587 = vsel %vm1586, %v1578, %v1583
          %v1588 = vrsqrt.pop %v1074
          %v1589 = vmul.f32 %v1588, %v1074
          %v1590 = vmul.f32 %v1589, %v1588
          %v1591 = vmul.f32 0.5, %v1590
          %v1592 = vsub.f32 1.5, %v1591
          %v1593 = vmul.f32 %v1588, %v1592
          %vm1594 = vweird.f32 %v1074
          %vm1595 = vweird.f32 %v1588
          %vm1596 = vmor %vm1594, %vm1595
          %v1597 = vsel %vm1596, %v1588, %v1593
          %v1598 = vrsqrt.pop %v1075
          %v1599 = vmul.f32 %v1598, %v1075
          %v1600 = vmul.f32 %v1599, %v1598
          %v1601 = vmul.f32 0.5, %v1600
          %v1602 = vsub.f32 1.5, %v1601
          %v1603 = vmul.f32 %v1598, %v1602
          %vm1604 = vweird.f32 %v1075
          %vm1605 = vweird.f32 %v1598
          %vm1606 = vmor %vm1604, %vm1605
          %v1607 = vsel %vm1606, %v1598, %v1603
          %v1608 = vrsqrt.pop %v1076
          %v1609 = vmul.f32 %v1608, %v1076
          %v1610 = vmul.f32 %v1609, %v1608
          %v1611 = vmul.f32 0.5, %v1610
          %v1612 = vsub.f32 1.5, %v1611
          %v1613 = vmul.f32 %v1608, %v1612
          %vm1614 = vweird.f32 %v1076
          %vm1615 = vweird.f32 %v1608
          %vm1616 = vmor %vm1614, %vm1615
          %v1617 = vsel %vm1616, %v1608, %v1613
          %v1618 = vrsqrt.pop %v1077
          %v1619 = vmul.f32 %v1618, %v1077
          %v1620 = vmul.f32 %v1619, %v1618
          %v1621 = vmul.f32 0.5, %v1620
          %v1622 = vsub.f32 1.5, %v1621
          %v1623 = vmul.f32 %v1618, %v1622
          %vm1624 = vweird.f32 %v1077
          %vm1625 = vweird.f32 %v1618
          %vm1626 = vmor %vm1624, %vm1625
          %v1627 = vsel %vm1626, %v1618, %v1623
          %v1628 = vrsqrt.pop %v1078
          %v1629 = vmul.f32 %v1628, %v1078
          %v1630 = vmul.f32 %v1629, %v1628
          %v1631 = vmul.f32 0.5, %v1630
          %v1632 = vsub.f32 1.5, %v1631
          %v1633 = vmul.f32 %v1628, %v1632
          %vm1634 = vweird.f32 %v1078
          %vm1635 = vweird.f32 %v1628
          %vm1636 = vmor %vm1634, %vm1635
          %v1637 = vsel %vm1636, %v1628, %v1633
          %v1638 = vrsqrt.pop %v1079
          %v1639 = vmul.f32 %v1638, %v1079
          %v1640 = vmul.f32 %v1639, %v1638
          %v1641 = vmul.f32 0.5, %v1640
          %v1642 = vsub.f32 1.5, %v1641
          %v1643 = vmul.f32 %v1638, %v1642
          %vm1644 = vweird.f32 %v1079
          %vm1645 = vweird.f32 %v1638
          %vm1646 = vmor %vm1644, %vm1645
          %v1647 = vsel %vm1646, %v1638, %v1643
          %v1648 = vrsqrt.pop %v1080
          %v1649 = vmul.f32 %v1648, %v1080
          %v1650 = vmul.f32 %v1649, %v1648
          %v1651 = vmul.f32 0.5, %v1650
          %v1652 = vsub.f32 1.5, %v1651
          %v1653 = vmul.f32 %v1648, %v1652
          %vm1654 = vweird.f32 %v1080
          %vm1655 = vweird.f32 %v1648
          %vm1656 = vmor %vm1654, %vm1655
          %v1657 = vsel %vm1656, %v1648, %v1653
          %v1658 = vrsqrt.pop %v1081
          %v1659 = vmul.f32 %v1658, %v1081
          %v1660 = vmul.f32 %v1659, %v1658
          %v1661 = vmul.f32 0.5, %v1660
          %v1662 = vsub.f32 1.5, %v1661
          %v1663 = vmul.f32 %v1658, %v1662
          %vm1664 = vweird.f32 %v1081
          %vm1665 = vweird.f32 %v1658
          %vm1666 = vmor %vm1664, %vm1665
          %v1667 = vsel %vm1666, %v1658, %v1663
          %v1668 = vrsqrt.pop %v1082
          %v1669 = vmul.f32 %v1668, %v1082
          %v1670 = vmul.f32 %v1669, %v1668
          %v1671 = vmul.f32 0.5, %v1670
          %v1672 = vsub.f32 1.5, %v1671
          %v1673 = vmul.f32 %v1668, %v1672
          %vm1674 = vweird.f32 %v1082
          %vm1675 = vweird.f32 %v1668
          %vm1676 = vmor %vm1674, %vm1675
          %v1677 = vsel %vm1676, %v1668, %v1673
          %v1678 = vrsqrt.pop %v1083
          %v1679 = vmul.f32 %v1678, %v1083
          %v1680 = vmul.f32 %v1679, %v1678
          %v1681 = vmul.f32 0.5, %v1680
          %v1682 = vsub.f32 1.5, %v1681
          %v1683 = vmul.f32 %v1678, %v1682
          %vm1684 = vweird.f32 %v1083
          %vm1685 = vweird.f32 %v1678
          %vm1686 = vmor %vm1684, %vm1685
          %v1687 = vsel %vm1686, %v1678, %v1683
          %v1688 = vrsqrt.pop %v1084
          %v1689 = vmul.f32 %v1688, %v1084
          %v1690 = vmul.f32 %v1689, %v1688
          %v1691 = vmul.f32 0.5, %v1690
          %v1692 = vsub.f32 1.5, %v1691
          %v1693 = vmul.f32 %v1688, %v1692
          %vm1694 = vweird.f32 %v1084
          %vm1695 = vweird.f32 %v1688
          %vm1696 = vmor %vm1694, %vm1695
          %v1697 = vsel %vm1696, %v1688, %v1693
          %v1698 = vrsqrt.pop %v1085
          %v1699 = vmul.f32 %v1698, %v1085
          %v1700 = vmul.f32 %v1699, %v1698
          %v1701 = vmul.f32 0.5, %v1700
          %v1702 = vsub.f32 1.5, %v1701
          %v1703 = vmul.f32 %v1698, %v1702
          %vm1704 = vweird.f32 %v1085
          %vm1705 = vweird.f32 %v1698
          %vm1706 = vmor %vm1704, %vm1705
          %v1707 = vsel %vm1706, %v1698, %v1703
          %v1708 = vrsqrt.pop %v1086
          %v1709 = vmul.f32 %v1708, %v1086
          %v1710 = vmul.f32 %v1709, %v1708
          %v1711 = vmul.f32 0.5, %v1710
          %v1712 = vsub.f32 1.5, %v1711
          %v1713 = vmul.f32 %v1708, %v1712
          %vm1714 = vweird.f32 %v1086
          %vm1715 = vweird.f32 %v1708
          %vm1716 = vmor %vm1714, %vm1715
          %v1717 = vsel %vm1716, %v1708, %v1713
          %v1718 = vrsqrt.pop %v1087
          %v1719 = vmul.f32 %v1718, %v1087
          %v1720 = vmul.f32 %v1719, %v1718
          %v1721 = vmul.f32 0.5, %v1720
          %v1722 = vsub.f32 1.5, %v1721
          %v1723 = vmul.f32 %v1718, %v1722
          %vm1724 = vweird.f32 %v1087
          %vm1725 = vweird.f32 %v1718
          %vm1726 = vmor %vm1724, %vm1725
          %v1727 = vsel %vm1726, %v1718, %v1723
          %v1728 = vmul.f32 %v960, %v1097
          %v1729 = vmul.f32 %v961, %v1107
          %v1730 = vmul.f32 %v962, %v1117
          %v1731 = vmul.f32 %v963, %v1127
          %v1732 = vmul.f32 %v964, %v1137
          %v1733 = vmul.f32 %v965, %v1147
          %v1734 = vmul.f32 %v966, %v1157
          %v1735 = vmul.f32 %v967, %v1167
          %v1736 = vmul.f32 %v968, %v1177
          %v1737 = vmul.f32 %v969, %v1187
          %v1738 = vmul.f32 %v970, %v1197
          %v1739 = vmul.f32 %v971, %v1207
          %v1740 = vmul.f32 %v972, %v1217
          %v1741 = vmul.f32 %v973, %v1227
          %v1742 = vmul.f32 %v974, %v1237
          %v1743 = vmul.f32 %v975, %v1247
          %v1744 = vmul.f32 %v976, %v1257
          %v1745 = vmul.f32 %v977, %v1267
          %v1746 = vmul.f32 %v978, %v1277
          %v1747 = vmul.f32 %v979, %v1287
          %v1748 = vmul.f32 %v980, %v1297
          %v1749 = vmul.f32 %v981, %v1307
          %v1750 = vmul.f32 %v982, %v1317
          %v1751 = vmul.f32 %v983, %v1327
          %v1752 = vmul.f32 %v984, %v1337
          %v1753 = vmul.f32 %v985, %v1347
          %v1754 = vmul.f32 %v986, %v1357
          %v1755 = vmul.f32 %v987, %v1367
          %v1756 = vmul.f32 %v988, %v1377
          %v1757 = vmul.f32 %v989, %v1387
          %v1758 = vmul.f32 %v990, %v1397
          %v1759 = vmul.f32 %v991, %v1407
          %v1760 = vmul.f32 %v992, %v1417
          %v1761 = vmul.f32 %v993, %v1427
          %v1762 = vmul.f32 %v994, %v1437
          %v1763 = vmul.f32 %v995, %v1447
          %v1764 = vmul.f32 %v996, %v1457
          %v1765 = vmul.f32 %v997, %v1467
          %v1766 = vmul.f32 %v998, %v1477
          %v1767 = vmul.f32 %v999, %v1487
          %v1768 = vmul.f32 %v1000, %v1497
          %v1769 = vmul.f32 %v1001, %v1507
          %v1770 = vmul.f32 %v1002, %v1517
          %v1771 = vmul.f32 %v1003, %v1527
          %v1772 = vmul.f32 %v1004, %v1537
          %v1773 = vmul.f32 %v1005, %v1547
          %v1774 = vmul.f32 %v1006, %v1557
          %v1775 = vmul.f32 %v1007, %v1567
          %v1776 = vmul.f32 %v1008, %v1577
          %v1777 = vmul.f32 %v1009, %v1587
          %v1778 = vmul.f32 %v1010, %v1597
          %v1779 = vmul.f32 %v1011, %v1607
          %v1780 = vmul.f32 %v1012, %v1617
          %v1781 = vmul.f32 %v1013, %v1627
          %v1782 = vmul.f32 %v1014, %v1637
          %v1783 = vmul.f32 %v1015, %v1647
          %v1784 = vmul.f32 %v1016, %v1657
          %v1785 = vmul.f32 %v1017, %v1667
          %v1786 = vmul.f32 %v1018, %v1677
          %v1787 = vmul.f32 %v1019, %v1687
          %v1788 = vmul.f32 %v1020, %v1697
          %v1789 = vmul.f32 %v1021, %v1707
          %v1790 = vmul.f32 %v1022, %v1717
          %v1791 = vmul.f32 %v1023, %v1727
          %v1792 = vpack.c.bf16 %v1728, %v1728
          %v1793 = vpack.c.bf16 %v1729, %v1729
          %v1794 = vpack.c.bf16 %v1730, %v1730
          %v1795 = vpack.c.bf16 %v1731, %v1731
          %v1796 = vpack.c.bf16 %v1732, %v1732
          %v1797 = vpack.c.bf16 %v1733, %v1733
          %v1798 = vpack.c.bf16 %v1734, %v1734
          %v1799 = vpack.c.bf16 %v1735, %v1735
          %v1800 = vpack.c.bf16 %v1736, %v1736
          %v1801 = vpack.c.bf16 %v1737, %v1737
          %v1802 = vpack.c.bf16 %v1738, %v1738
          %v1803 = vpack.c.bf16 %v1739, %v1739
          %v1804 = vpack.c.bf16 %v1740, %v1740
          %v1805 = vpack.c.bf16 %v1741, %v1741
          %v1806 = vpack.c.bf16 %v1742, %v1742
          %v1807 = vpack.c.bf16 %v1743, %v1743
          %v1808 = vpack.c.bf16 %v1744, %v1744
          %v1809 = vpack.c.bf16 %v1745, %v1745
          %v1810 = vpack.c.bf16 %v1746, %v1746
          %v1811 = vpack.c.bf16 %v1747, %v1747
          %v1812 = vpack.c.bf16 %v1748, %v1748
          %v1813 = vpack.c.bf16 %v1749, %v1749
          %v1814 = vpack.c.bf16 %v1750, %v1750
          %v1815 = vpack.c.bf16 %v1751, %v1751
          %v1816 = vpack.c.bf16 %v1752, %v1752
          %v1817 = vpack.c.bf16 %v1753, %v1753
          %v1818 = vpack.c.bf16 %v1754, %v1754
          %v1819 = vpack.c.bf16 %v1755, %v1755
          %v1820 = vpack.c.bf16 %v1756, %v1756
          %v1821 = vpack.c.bf16 %v1757, %v1757
          %v1822 = vpack.c.bf16 %v1758, %v1758
          %v1823 = vpack.c.bf16 %v1759, %v1759
          %v1824 = vpack.c.bf16 %v1760, %v1760
          %v1825 = vpack.c.bf16 %v1761, %v1761
          %v1826 = vpack.c.bf16 %v1762, %v1762
          %v1827 = vpack.c.bf16 %v1763, %v1763
          %v1828 = vpack.c.bf16 %v1764, %v1764
          %v1829 = vpack.c.bf16 %v1765, %v1765
          %v1830 = vpack.c.bf16 %v1766, %v1766
          %v1831 = vpack.c.bf16 %v1767, %v1767
          %v1832 = vpack.c.bf16 %v1768, %v1768
          %v1833 = vpack.c.bf16 %v1769, %v1769
          %v1834 = vpack.c.bf16 %v1770, %v1770
          %v1835 = vpack.c.bf16 %v1771, %v1771
          %v1836 = vpack.c.bf16 %v1772, %v1772
          %v1837 = vpack.c.bf16 %v1773, %v1773
          %v1838 = vpack.c.bf16 %v1774, %v1774
          %v1839 = vpack.c.bf16 %v1775, %v1775
          %v1840 = vpack.c.bf16 %v1776, %v1776
          %v1841 = vpack.c.bf16 %v1777, %v1777
          %v1842 = vpack.c.bf16 %v1778, %v1778
          %v1843 = vpack.c.bf16 %v1779, %v1779
          %v1844 = vpack.c.bf16 %v1780, %v1780
          %v1845 = vpack.c.bf16 %v1781, %v1781
          %v1846 = vpack.c.bf16 %v1782, %v1782
          %v1847 = vpack.c.bf16 %v1783, %v1783
          %v1848 = vpack.c.bf16 %v1784, %v1784
          %v1849 = vpack.c.bf16 %v1785, %v1785
          %v1850 = vpack.c.bf16 %v1786, %v1786
          %v1851 = vpack.c.bf16 %v1787, %v1787
          %v1852 = vpack.c.bf16 %v1788, %v1788
          %v1853 = vpack.c.bf16 %v1789, %v1789
          %v1854 = vpack.c.bf16 %v1790, %v1790
          %v1855 = vpack.c.bf16 %v1791, %v1791
          %1856 = vst [vmem:[#allocation2] sm:$0xf] %v1792
          %1857 = vst [vmem:[#allocation2 + $0x4] sm:$0xf] %v1793
          %1858 = vst [vmem:[#allocation2 + $0x8] sm:$0xf] %v1794
          %1859 = vst [vmem:[#allocation2 + $0xc] sm:$0xf] %v1795
          %1860 = vst [vmem:[#allocation2 + $0x10] sm:$0xf] %v1796
          %1861 = vst [vmem:[#allocation2 + $0x14] sm:$0xf] %v1797
          %1862 = vst [vmem:[#allocation2 + $0x18] sm:$0xf] %v1798
          %1863 = vst [vmem:[#allocation2 + $0x1c] sm:$0xf] %v1799
          %1864 = vst [vmem:[#allocation2 + $0x20] sm:$0xf] %v1800
          %1865 = vst [vmem:[#allocation2 + $0x24] sm:$0xf] %v1801
          %1866 = vst [vmem:[#allocation2 + $0x28] sm:$0xf] %v1802
          %1867 = vst [vmem:[#allocation2 + $0x2c] sm:$0xf] %v1803
          %1868 = vst [vmem:[#allocation2 + $0x30] sm:$0xf] %v1804
          %1869 = vst [vmem:[#allocation2 + $0x34] sm:$0xf] %v1805
          %1870 = vst [vmem:[#allocation2 + $0x38] sm:$0xf] %v1806
          %1871 = vst [vmem:[#allocation2 + $0x3c] sm:$0xf] %v1807
          %1872 = vst [vmem:[#allocation2 + $0x40] sm:$0xf] %v1808
          %1873 = vst [vmem:[#allocation2 + $0x44] sm:$0xf] %v1809
          %1874 = vst [vmem:[#allocation2 + $0x48] sm:$0xf] %v1810
          %1875 = vst [vmem:[#allocation2 + $0x4c] sm:$0xf] %v1811
          %1876 = vst [vmem:[#allocation2 + $0x50] sm:$0xf] %v1812
          %1877 = vst [vmem:[#allocation2 + $0x54] sm:$0xf] %v1813
          %1878 = vst [vmem:[#allocation2 + $0x58] sm:$0xf] %v1814
          %1879 = vst [vmem:[#allocation2 + $0x5c] sm:$0xf] %v1815
          %1880 = vst [vmem:[#allocation2 + $0x60] sm:$0xf] %v1816
          %1881 = vst [vmem:[#allocation2 + $0x64] sm:$0xf] %v1817
          %1882 = vst [vmem:[#allocation2 + $0x68] sm:$0xf] %v1818
          %1883 = vst [vmem:[#allocation2 + $0x6c] sm:$0xf] %v1819
          %1884 = vst [vmem:[#allocation2 + $0x70] sm:$0xf] %v1820
          %1885 = vst [vmem:[#allocation2 + $0x74] sm:$0xf] %v1821
          %1886 = vst [vmem:[#allocation2 + $0x78] sm:$0xf] %v1822
          %1887 = vst [vmem:[#allocation2 + $0x7c] sm:$0xf] %v1823
          %1888 = vst [vmem:[#allocation2 + $0x80] sm:$0xf] %v1824
          %1889 = vst [vmem:[#allocation2 + $0x84] sm:$0xf] %v1825
          %1890 = vst [vmem:[#allocation2 + $0x88] sm:$0xf] %v1826
          %1891 = vst [vmem:[#allocation2 + $0x8c] sm:$0xf] %v1827
          %1892 = vst [vmem:[#allocation2 + $0x90] sm:$0xf] %v1828
          %1893 = vst [vmem:[#allocation2 + $0x94] sm:$0xf] %v1829
          %1894 = vst [vmem:[#allocation2 + $0x98] sm:$0xf] %v1830
          %1895 = vst [vmem:[#allocation2 + $0x9c] sm:$0xf] %v1831
          %1896 = vst [vmem:[#allocation2 + $0xa0] sm:$0xf] %v1832
          %1897 = vst [vmem:[#allocation2 + $0xa4] sm:$0xf] %v1833
          %1898 = vst [vmem:[#allocation2 + $0xa8] sm:$0xf] %v1834
          %1899 = vst [vmem:[#allocation2 + $0xac] sm:$0xf] %v1835
          %1900 = vst [vmem:[#allocation2 + $0xb0] sm:$0xf] %v1836
          %1901 = vst [vmem:[#allocation2 + $0xb4] sm:$0xf] %v1837
          %1902 = vst [vmem:[#allocation2 + $0xb8] sm:$0xf] %v1838
          %1903 = vst [vmem:[#allocation2 + $0xbc] sm:$0xf] %v1839
          %1904 = vst [vmem:[#allocation2 + $0xc0] sm:$0xf] %v1840
          %1905 = vst [vmem:[#allocation2 + $0xc4] sm:$0xf] %v1841
          %1906 = vst [vmem:[#allocation2 + $0xc8] sm:$0xf] %v1842
          %1907 = vst [vmem:[#allocation2 + $0xcc] sm:$0xf] %v1843
          %1908 = vst [vmem:[#allocation2 + $0xd0] sm:$0xf] %v1844
          %1909 = vst [vmem:[#allocation2 + $0xd4] sm:$0xf] %v1845
          %1910 = vst [vmem:[#allocation2 + $0xd8] sm:$0xf] %v1846
          %1911 = vst [vmem:[#allocation2 + $0xdc] sm:$0xf] %v1847
          %1912 = vst [vmem:[#allocation2 + $0xe0] sm:$0xf] %v1848
          %1913 = vst [vmem:[#allocation2 + $0xe4] sm:$0xf] %v1849
          %1914 = vst [vmem:[#allocation2 + $0xe8] sm:$0xf] %v1850
          %1915 = vst [vmem:[#allocation2 + $0xec] sm:$0xf] %v1851
          %1916 = vst [vmem:[#allocation2 + $0xf0] sm:$0xf] %v1852
          %1917 = vst [vmem:[#allocation2 + $0xf4] sm:$0xf] %v1853
          %1918 = vst [vmem:[#allocation2 + $0xf8] sm:$0xf] %v1854
          %1919 = vst [vmem:[#allocation2 + $0xfc] sm:$0xf] %v1855
        $region44: #{tpu_custom_call.1} parent=31 // pred_fallthru
          _
        %v1920 = vld [vmem:[#allocation2] sm:$0xf]
        %v1921 = vld [vmem:[#allocation2 + $0x4] sm:$0xf]
        %v1922 = vld [vmem:[#allocation2 + $0x8] sm:$0xf]
        %v1923 = vld [vmem:[#allocation2 + $0xc] sm:$0xf]
        %v1924 = vld [vmem:[#allocation2 + $0x10] sm:$0xf]
        %v1925 = vld [vmem:[#allocation2 + $0x14] sm:$0xf]
        %v1926 = vld [vmem:[#allocation2 + $0x18] sm:$0xf]
        %v1927 = vld [vmem:[#allocation2 + $0x1c] sm:$0xf]
        %v1928 = vld [vmem:[#allocation2 + $0x20] sm:$0xf]
        %v1929 = vld [vmem:[#allocation2 + $0x24] sm:$0xf]
        %v1930 = vld [vmem:[#allocation2 + $0x28] sm:$0xf]
        %v1931 = vld [vmem:[#allocation2 + $0x2c] sm:$0xf]
        %v1932 = vld [vmem:[#allocation2 + $0x30] sm:$0xf]
        %v1933 = vld [vmem:[#allocation2 + $0x34] sm:$0xf]
        %v1934 = vld [vmem:[#allocation2 + $0x38] sm:$0xf]
        %v1935 = vld [vmem:[#allocation2 + $0x3c] sm:$0xf]
        %v1936 = vld [vmem:[#allocation2 + $0x40] sm:$0xf]
        %v1937 = vld [vmem:[#allocation2 + $0x44] sm:$0xf]
        %v1938 = vld [vmem:[#allocation2 + $0x48] sm:$0xf]
        %v1939 = vld [vmem:[#allocation2 + $0x4c] sm:$0xf]
        %v1940 = vld [vmem:[#allocation2 + $0x50] sm:$0xf]
        %v1941 = vld [vmem:[#allocation2 + $0x54] sm:$0xf]
        %v1942 = vld [vmem:[#allocation2 + $0x58] sm:$0xf]
        %v1943 = vld [vmem:[#allocation2 + $0x5c] sm:$0xf]
        %v1944 = vld [vmem:[#allocation2 + $0x60] sm:$0xf]
        %v1945 = vld [vmem:[#allocation2 + $0x64] sm:$0xf]
        %v1946 = vld [vmem:[#allocation2 + $0x68] sm:$0xf]
        %v1947 = vld [vmem:[#allocation2 + $0x6c] sm:$0xf]
        %v1948 = vld [vmem:[#allocation2 + $0x70] sm:$0xf]
        %v1949 = vld [vmem:[#allocation2 + $0x74] sm:$0xf]
        %v1950 = vld [vmem:[#allocation2 + $0x78] sm:$0xf]
        %v1951 = vld [vmem:[#allocation2 + $0x7c] sm:$0xf]
        %v1952 = vld [vmem:[#allocation2 + $0x80] sm:$0xf]
        %v1953 = vld [vmem:[#allocation2 + $0x84] sm:$0xf]
        %v1954 = vld [vmem:[#allocation2 + $0x88] sm:$0xf]
        %v1955 = vld [vmem:[#allocation2 + $0x8c] sm:$0xf]
        %v1956 = vld [vmem:[#allocation2 + $0x90] sm:$0xf]
        %v1957 = vld [vmem:[#allocation2 + $0x94] sm:$0xf]
        %v1958 = vld [vmem:[#allocation2 + $0x98] sm:$0xf]
        %v1959 = vld [vmem:[#allocation2 + $0x9c] sm:$0xf]
        %v1960 = vld [vmem:[#allocation2 + $0xa0] sm:$0xf]
        %v1961 = vld [vmem:[#allocation2 + $0xa4] sm:$0xf]
        %v1962 = vld [vmem:[#allocation2 + $0xa8] sm:$0xf]
        %v1963 = vld [vmem:[#allocation2 + $0xac] sm:$0xf]
        %v1964 = vld [vmem:[#allocation2 + $0xb0] sm:$0xf]
        %v1965 = vld [vmem:[#allocation2 + $0xb4] sm:$0xf]
        %v1966 = vld [vmem:[#allocation2 + $0xb8] sm:$0xf]
        %v1967 = vld [vmem:[#allocation2 + $0xbc] sm:$0xf]
        %v1968 = vld [vmem:[#allocation2 + $0xc0] sm:$0xf]
        %v1969 = vld [vmem:[#allocation2 + $0xc4] sm:$0xf]
        %v1970 = vld [vmem:[#allocation2 + $0xc8] sm:$0xf]
        %v1971 = vld [vmem:[#allocation2 + $0xcc] sm:$0xf]
        %v1972 = vld [vmem:[#allocation2 + $0xd0] sm:$0xf]
        %v1973 = vld [vmem:[#allocation2 + $0xd4] sm:$0xf]
        %v1974 = vld [vmem:[#allocation2 + $0xd8] sm:$0xf]
        %v1975 = vld [vmem:[#allocation2 + $0xdc] sm:$0xf]
        %v1976 = vld [vmem:[#allocation2 + $0xe0] sm:$0xf]
        %v1977 = vld [vmem:[#allocation2 + $0xe4] sm:$0xf]
        %v1978 = vld [vmem:[#allocation2 + $0xe8] sm:$0xf]
        %v1979 = vld [vmem:[#allocation2 + $0xec] sm:$0xf]
        %v1980 = vld [vmem:[#allocation2 + $0xf0] sm:$0xf]
        %v1981 = vld [vmem:[#allocation2 + $0xf4] sm:$0xf]
        %v1982 = vld [vmem:[#allocation2 + $0xf8] sm:$0xf]
        %v1983 = vld [vmem:[#allocation2 + $0xfc] sm:$0xf]
        %v1984 = vld [vmem:[#allocation6] sm:$0xf]
        %v1985 = vld [vmem:[#allocation6 + $0x4] sm:$0xf]
        %v1986 = vld [vmem:[#allocation6 + $0x8] sm:$0xf]
        %v1987 = vld [vmem:[#allocation6 + $0xc] sm:$0xf]
        %v1988 = vld [vmem:[#allocation6 + $0x10] sm:$0xf]
        %v1989 = vld [vmem:[#allocation6 + $0x14] sm:$0xf]
        %v1990 = vld [vmem:[#allocation6 + $0x18] sm:$0xf]
        %v1991 = vld [vmem:[#allocation6 + $0x1c] sm:$0xf]
        %v1992 = vld [vmem:[#allocation6 + $0x20] sm:$0xf]
        %v1993 = vld [vmem:[#allocation6 + $0x24] sm:$0xf]
        %v1994 = vld [vmem:[#allocation6 + $0x28] sm:$0xf]
        %v1995 = vld [vmem:[#allocation6 + $0x2c] sm:$0xf]
        %v1996 = vld [vmem:[#allocation6 + $0x30] sm:$0xf]
        %v1997 = vld [vmem:[#allocation6 + $0x34] sm:$0xf]
        %v1998 = vld [vmem:[#allocation6 + $0x38] sm:$0xf]
        %v1999 = vld [vmem:[#allocation6 + $0x3c] sm:$0xf]
        %v2000 = vld [vmem:[%s243] sm:$0x1]
        %v2002 = vperm.slane %v2000, 0
        %v2068 = vunpack.c.l.b16 %v1920
        %v2069 = vunpack.c.l.b16 %v1921
        %v2070 = vunpack.c.l.b16 %v1922
        %v2071 = vunpack.c.l.b16 %v1923
        %v2072 = vunpack.c.l.b16 %v1924
        %v2073 = vunpack.c.l.b16 %v1925
        %v2074 = vunpack.c.l.b16 %v1926
        %v2075 = vunpack.c.l.b16 %v1927
        %v2076 = vunpack.c.l.b16 %v1928
        %v2077 = vunpack.c.l.b16 %v1929
        %v2078 = vunpack.c.l.b16 %v1930
        %v2079 = vunpack.c.l.b16 %v1931
        %v2080 = vunpack.c.l.b16 %v1932
        %v2081 = vunpack.c.l.b16 %v1933
        %v2082 = vunpack.c.l.b16 %v1934
        %v2083 = vunpack.c.l.b16 %v1935
        %v2084 = vunpack.c.l.b16 %v1936
        %v2085 = vunpack.c.l.b16 %v1937
        %v2086 = vunpack.c.l.b16 %v1938
        %v2087 = vunpack.c.l.b16 %v1939
        %v2088 = vunpack.c.l.b16 %v1940
        %v2089 = vunpack.c.l.b16 %v1941
        %v2090 = vunpack.c.l.b16 %v1942
        %v2091 = vunpack.c.l.b16 %v1943
        %v2092 = vunpack.c.l.b16 %v1944
        %v2093 = vunpack.c.l.b16 %v1945
        %v2094 = vunpack.c.l.b16 %v1946
        %v2095 = vunpack.c.l.b16 %v1947
        %v2096 = vunpack.c.l.b16 %v1948
        %v2097 = vunpack.c.l.b16 %v1949
        %v2098 = vunpack.c.l.b16 %v1950
        %v2099 = vunpack.c.l.b16 %v1951
        %v2100 = vunpack.c.l.b16 %v1952
        %v2101 = vunpack.c.l.b16 %v1953
        %v2102 = vunpack.c.l.b16 %v1954
        %v2103 = vunpack.c.l.b16 %v1955
        %v2104 = vunpack.c.l.b16 %v1956
        %v2105 = vunpack.c.l.b16 %v1957
        %v2106 = vunpack.c.l.b16 %v1958
        %v2107 = vunpack.c.l.b16 %v1959
        %v2108 = vunpack.c.l.b16 %v1960
        %v2109 = vunpack.c.l.b16 %v1961
        %v2110 = vunpack.c.l.b16 %v1962
        %v2111 = vunpack.c.l.b16 %v1963
        %v2112 = vunpack.c.l.b16 %v1964
        %v2113 = vunpack.c.l.b16 %v1965
        %v2114 = vunpack.c.l.b16 %v1966
        %v2115 = vunpack.c.l.b16 %v1967
        %v2116 = vunpack.c.l.b16 %v1968
        %v2117 = vunpack.c.l.b16 %v1969
        %v2118 = vunpack.c.l.b16 %v1970
        %v2119 = vunpack.c.l.b16 %v1971
        %v2120 = vunpack.c.l.b16 %v1972
        %v2121 = vunpack.c.l.b16 %v1973
        %v2122 = vunpack.c.l.b16 %v1974
        %v2123 = vunpack.c.l.b16 %v1975
        %v2124 = vunpack.c.l.b16 %v1976
        %v2125 = vunpack.c.l.b16 %v1977
        %v2126 = vunpack.c.l.b16 %v1978
        %v2127 = vunpack.c.l.b16 %v1979
        %v2128 = vunpack.c.l.b16 %v1980
        %v2129 = vunpack.c.l.b16 %v1981
        %v2130 = vunpack.c.l.b16 %v1982
        %v2131 = vunpack.c.l.b16 %v1983
        %v2132 = vpack.c.b16 %v2069, %v2068
        %v2133 = vpack.c.b16 %v2071, %v2070
        %v2134 = vpack.c.b16 %v2073, %v2072
        %v2135 = vpack.c.b16 %v2075, %v2074
        %v2136 = vpack.c.b16 %v2077, %v2076
        %v2137 = vpack.c.b16 %v2079, %v2078
        %v2138 = vpack.c.b16 %v2081, %v2080
        %v2139 = vpack.c.b16 %v2083, %v2082
        %v2140 = vpack.c.b16 %v2085, %v2084
        %v2141 = vpack.c.b16 %v2087, %v2086
        %v2142 = vpack.c.b16 %v2089, %v2088
        %v2143 = vpack.c.b16 %v2091, %v2090
        %v2144 = vpack.c.b16 %v2093, %v2092
        %v2145 = vpack.c.b16 %v2095, %v2094
        %v2146 = vpack.c.b16 %v2097, %v2096
        %v2147 = vpack.c.b16 %v2099, %v2098
        %v2148 = vpack.c.b16 %v2101, %v2100
        %v2149 = vpack.c.b16 %v2103, %v2102
        %v2150 = vpack.c.b16 %v2105, %v2104
        %v2151 = vpack.c.b16 %v2107, %v2106
        %v2152 = vpack.c.b16 %v2109, %v2108
        %v2153 = vpack.c.b16 %v2111, %v2110
        %v2154 = vpack.c.b16 %v2113, %v2112
        %v2155 = vpack.c.b16 %v2115, %v2114
        %v2156 = vpack.c.b16 %v2117, %v2116
        %v2157 = vpack.c.b16 %v2119, %v2118
        %v2158 = vpack.c.b16 %v2121, %v2120
        %v2159 = vpack.c.b16 %v2123, %v2122
        %v2160 = vpack.c.b16 %v2125, %v2124
        %v2161 = vpack.c.b16 %v2127, %v2126
        %v2162 = vpack.c.b16 %v2129, %v2128
        %v2163 = vpack.c.b16 %v2131, %v2130
        %v2212 = vunpack.c.l.b16 %v1984
        %v2213 = vunpack.c.l.b16 %v1985
        %v2214 = vunpack.c.l.b16 %v1986
        %v2215 = vunpack.c.l.b16 %v1987
        %v2216 = vunpack.c.l.b16 %v1988
        %v2217 = vunpack.c.l.b16 %v1989
        %v2218 = vunpack.c.l.b16 %v1990
        %v2219 = vunpack.c.l.b16 %v1991
        %v2220 = vunpack.c.l.b16 %v1992
        %v2221 = vunpack.c.l.b16 %v1993
        %v2222 = vunpack.c.l.b16 %v1994
        %v2223 = vunpack.c.l.b16 %v1995
        %v2224 = vunpack.c.l.b16 %v1996
        %v2225 = vunpack.c.l.b16 %v1997
        %v2226 = vunpack.c.l.b16 %v1998
        %v2227 = vunpack.c.l.b16 %v1999
        %v2228 = vpack.c.b16 %v2213, %v2212
        %v2229 = vpack.c.b16 %v2215, %v2214
        %v2230 = vpack.c.b16 %v2217, %v2216
        %v2231 = vpack.c.b16 %v2219, %v2218
        %v2232 = vpack.c.b16 %v2221, %v2220
        %v2233 = vpack.c.b16 %v2223, %v2222
        %v2234 = vpack.c.b16 %v2225, %v2224
        %v2235 = vpack.c.b16 %v2227, %v2226
        %2244 = vmatpush.bf16.msra.mxu0 %v2235
        %2245 = vmatpush.bf16.msra.mxu0 %v2234
        %2246 = vmatpush.bf16.msra.mxu0 %v2233
        %2247 = vmatpush.bf16.msra.mxu0 %v2232
        %2248 = vmatpush.bf16.msra.mxu0 %v2231
        %2249 = vmatpush.bf16.msra.mxu0 %v2230
        %2250 = vmatpush.bf16.msra.mxu0 %v2229
        %2251 = vmatpush.bf16.msra.mxu0 %v2228
        %2252 = vmatmul.bf16.gmra.mxu0 %v2132
        %v2253 = vpop.f32.mrf.mxu0
        %v2254 = vadd.f32 %v2002, %v2253
        %v2255 = vpop.f32.mrf.mxu0
        %v2256 = vadd.f32 %v2002, %v2255
        %2257 = vmatmul.bf16.gmra.mxu0 %v2133
        %v2258 = vpop.f32.mrf.mxu0
        %v2259 = vadd.f32 %v2002, %v2258
        %v2260 = vpop.f32.mrf.mxu0
        %v2261 = vadd.f32 %v2002, %v2260
        %2262 = vmatmul.bf16.gmra.mxu0 %v2134
        %v2263 = vpop.f32.mrf.mxu0
        %v2264 = vadd.f32 %v2002, %v2263
        %v2265 = vpop.f32.mrf.mxu0
        %v2266 = vadd.f32 %v2002, %v2265
        %2267 = vmatmul.bf16.gmra.mxu0 %v2135
        %v2268 = vpop.f32.mrf.mxu0
        %v2269 = vadd.f32 %v2002, %v2268
        %v2270 = vpop.f32.mrf.mxu0
        %v2271 = vadd.f32 %v2002, %v2270
        %2272 = vmatmul.bf16.gmra.mxu0 %v2136
        %v2273 = vpop.f32.mrf.mxu0
        %v2274 = vadd.f32 %v2002, %v2273
        %v2275 = vpop.f32.mrf.mxu0
        %v2276 = vadd.f32 %v2002, %v2275
        %2277 = vmatmul.bf16.gmra.mxu0 %v2137
        %v2278 = vpop.f32.mrf.mxu0
        %v2279 = vadd.f32 %v2002, %v2278
        %v2280 = vpop.f32.mrf.mxu0
        %v2281 = vadd.f32 %v2002, %v2280
        %2282 = vmatmul.bf16.gmra.mxu0 %v2138
        %v2283 = vpop.f32.mrf.mxu0
        %v2284 = vadd.f32 %v2002, %v2283
        %v2285 = vpop.f32.mrf.mxu0
        %v2286 = vadd.f32 %v2002, %v2285
        %2287 = vmatmul.bf16.gmra.mxu0 %v2139
        %v2288 = vpop.f32.mrf.mxu0
        %v2289 = vadd.f32 %v2002, %v2288
        %v2290 = vpop.f32.mrf.mxu0
        %v2291 = vadd.f32 %v2002, %v2290
        %2292 = vmatmul.bf16.gmra.mxu0 %v2140
        %v2293 = vpop.f32.mrf.mxu0
        %v2294 = vadd.f32 %v2002, %v2293
        %v2295 = vpop.f32.mrf.mxu0
        %v2296 = vadd.f32 %v2002, %v2295
        %2297 = vmatmul.bf16.gmra.mxu0 %v2141
        %v2298 = vpop.f32.mrf.mxu0
        %v2299 = vadd.f32 %v2002, %v2298
        %v2300 = vpop.f32.mrf.mxu0
        %v2301 = vadd.f32 %v2002, %v2300
        %2302 = vmatmul.bf16.gmra.mxu0 %v2142
        %v2303 = vpop.f32.mrf.mxu0
        %v2304 = vadd.f32 %v2002, %v2303
        %v2305 = vpop.f32.mrf.mxu0
        %v2306 = vadd.f32 %v2002, %v2305
        %2307 = vmatmul.bf16.gmra.mxu0 %v2143
        %v2308 = vpop.f32.mrf.mxu0
        %v2309 = vadd.f32 %v2002, %v2308
        %v2310 = vpop.f32.mrf.mxu0
        %v2311 = vadd.f32 %v2002, %v2310
        %2312 = vmatmul.bf16.gmra.mxu0 %v2144
        %v2313 = vpop.f32.mrf.mxu0
        %v2314 = vadd.f32 %v2002, %v2313
        %v2315 = vpop.f32.mrf.mxu0
        %v2316 = vadd.f32 %v2002, %v2315
        %2317 = vmatmul.bf16.gmra.mxu0 %v2145
        %v2318 = vpop.f32.mrf.mxu0
        %v2319 = vadd.f32 %v2002, %v2318
        %v2320 = vpop.f32.mrf.mxu0
        %v2321 = vadd.f32 %v2002, %v2320
        %2322 = vmatmul.bf16.gmra.mxu0 %v2146
        %v2323 = vpop.f32.mrf.mxu0
        %v2324 = vadd.f32 %v2002, %v2323
        %v2325 = vpop.f32.mrf.mxu0
        %v2326 = vadd.f32 %v2002, %v2325
        %2327 = vmatmul.bf16.gmra.mxu0 %v2147
        %v2328 = vpop.f32.mrf.mxu0
        %v2329 = vadd.f32 %v2002, %v2328
        %v2330 = vpop.f32.mrf.mxu0
        %v2331 = vadd.f32 %v2002, %v2330
        %2332 = vmatmul.bf16.gmra.mxu0 %v2148
        %v2333 = vpop.f32.mrf.mxu0
        %v2334 = vadd.f32 %v2002, %v2333
        %v2335 = vpop.f32.mrf.mxu0
        %v2336 = vadd.f32 %v2002, %v2335
        %2337 = vmatmul.bf16.gmra.mxu0 %v2149
        %v2338 = vpop.f32.mrf.mxu0
        %v2339 = vadd.f32 %v2002, %v2338
        %v2340 = vpop.f32.mrf.mxu0
        %v2341 = vadd.f32 %v2002, %v2340
        %2342 = vmatmul.bf16.gmra.mxu0 %v2150
        %v2343 = vpop.f32.mrf.mxu0
        %v2344 = vadd.f32 %v2002, %v2343
        %v2345 = vpop.f32.mrf.mxu0
        %v2346 = vadd.f32 %v2002, %v2345
        %2347 = vmatmul.bf16.gmra.mxu0 %v2151
        %v2348 = vpop.f32.mrf.mxu0
        %v2349 = vadd.f32 %v2002, %v2348
        %v2350 = vpop.f32.mrf.mxu0
        %v2351 = vadd.f32 %v2002, %v2350
        %2352 = vmatmul.bf16.gmra.mxu0 %v2152
        %v2353 = vpop.f32.mrf.mxu0
        %v2354 = vadd.f32 %v2002, %v2353
        %v2355 = vpop.f32.mrf.mxu0
        %v2356 = vadd.f32 %v2002, %v2355
        %2357 = vmatmul.bf16.gmra.mxu0 %v2153
        %v2358 = vpop.f32.mrf.mxu0
        %v2359 = vadd.f32 %v2002, %v2358
        %v2360 = vpop.f32.mrf.mxu0
        %v2361 = vadd.f32 %v2002, %v2360
        %2362 = vmatmul.bf16.gmra.mxu0 %v2154
        %v2363 = vpop.f32.mrf.mxu0
        %v2364 = vadd.f32 %v2002, %v2363
        %v2365 = vpop.f32.mrf.mxu0
        %v2366 = vadd.f32 %v2002, %v2365
        %2367 = vmatmul.bf16.gmra.mxu0 %v2155
        %v2368 = vpop.f32.mrf.mxu0
        %v2369 = vadd.f32 %v2002, %v2368
        %v2370 = vpop.f32.mrf.mxu0
        %v2371 = vadd.f32 %v2002, %v2370
        %2372 = vmatmul.bf16.gmra.mxu0 %v2156
        %v2373 = vpop.f32.mrf.mxu0
        %v2374 = vadd.f32 %v2002, %v2373
        %v2375 = vpop.f32.mrf.mxu0
        %v2376 = vadd.f32 %v2002, %v2375
        %2377 = vmatmul.bf16.gmra.mxu0 %v2157
        %v2378 = vpop.f32.mrf.mxu0
        %v2379 = vadd.f32 %v2002, %v2378
        %v2380 = vpop.f32.mrf.mxu0
        %v2381 = vadd.f32 %v2002, %v2380
        %2382 = vmatmul.bf16.gmra.mxu0 %v2158
        %v2383 = vpop.f32.mrf.mxu0
        %v2384 = vadd.f32 %v2002, %v2383
        %v2385 = vpop.f32.mrf.mxu0
        %v2386 = vadd.f32 %v2002, %v2385
        %2387 = vmatmul.bf16.gmra.mxu0 %v2159
        %v2388 = vpop.f32.mrf.mxu0
        %v2389 = vadd.f32 %v2002, %v2388
        %v2390 = vpop.f32.mrf.mxu0
        %v2391 = vadd.f32 %v2002, %v2390
        %2392 = vmatmul.bf16.gmra.mxu0 %v2160
        %v2393 = vpop.f32.mrf.mxu0
        %v2394 = vadd.f32 %v2002, %v2393
        %v2395 = vpop.f32.mrf.mxu0
        %v2396 = vadd.f32 %v2002, %v2395
        %2397 = vmatmul.bf16.gmra.mxu0 %v2161
        %v2398 = vpop.f32.mrf.mxu0
        %v2399 = vadd.f32 %v2002, %v2398
        %v2400 = vpop.f32.mrf.mxu0
        %v2401 = vadd.f32 %v2002, %v2400
        %2402 = vmatmul.bf16.gmra.mxu0 %v2162
        %v2403 = vpop.f32.mrf.mxu0
        %v2404 = vadd.f32 %v2002, %v2403
        %v2405 = vpop.f32.mrf.mxu0
        %v2406 = vadd.f32 %v2002, %v2405
        %2407 = vmatmul.bf16.gmra.mxu0 %v2163
        %v2408 = vpop.f32.mrf.mxu0
        %v2409 = vadd.f32 %v2002, %v2408
        %v2410 = vpop.f32.mrf.mxu0
        %v2411 = vadd.f32 %v2002, %v2410
        %2412 = vdwg.mxu0
        %2413 = vst [vmem:[%s239] sm:$0xff] %v2254
        %2414 = vst [vmem:[%s239 + $0x8] sm:$0xff] %v2256
        %2415 = vst [vmem:[%s239 + $0x10] sm:$0xff] %v2259
        %2416 = vst [vmem:[%s239 + $0x18] sm:$0xff] %v2261
        %2417 = vst [vmem:[%s239 + $0x20] sm:$0xff] %v2264
        %2418 = vst [vmem:[%s239 + $0x28] sm:$0xff] %v2266
        %2419 = vst [vmem:[%s239 + $0x30] sm:$0xff] %v2269
        %2420 = vst [vmem:[%s239 + $0x38] sm:$0xff] %v2271
        %2421 = vst [vmem:[%s239 + $0x40] sm:$0xff] %v2274
        %2422 = vst [vmem:[%s239 + $0x48] sm:$0xff] %v2276
        %2423 = vst [vmem:[%s239 + $0x50] sm:$0xff] %v2279
        %2424 = vst [vmem:[%s239 + $0x58] sm:$0xff] %v2281
        %2425 = vst [vmem:[%s239 + $0x60] sm:$0xff] %v2284
        %2426 = vst [vmem:[%s239 + $0x68] sm:$0xff] %v2286
        %2427 = vst [vmem:[%s239 + $0x70] sm:$0xff] %v2289
        %2428 = vst [vmem:[%s239 + $0x78] sm:$0xff] %v2291
        %2429 = vst [vmem:[%s239 + $0x80] sm:$0xff] %v2294
        %2430 = vst [vmem:[%s239 + $0x88] sm:$0xff] %v2296
        %2431 = vst [vmem:[%s239 + $0x90] sm:$0xff] %v2299
        %2432 = vst [vmem:[%s239 + $0x98] sm:$0xff] %v2301
        %2433 = vst [vmem:[%s239 + $0xa0] sm:$0xff] %v2304
        %2434 = vst [vmem:[%s239 + $0xa8] sm:$0xff] %v2306
        %2435 = vst [vmem:[%s239 + $0xb0] sm:$0xff] %v2309
        %2436 = vst [vmem:[%s239 + $0xb8] sm:$0xff] %v2311
        %2437 = vst [vmem:[%s239 + $0xc0] sm:$0xff] %v2314
        %2438 = vst [vmem:[%s239 + $0xc8] sm:$0xff] %v2316
        %2439 = vst [vmem:[%s239 + $0xd0] sm:$0xff] %v2319
        %2440 = vst [vmem:[%s239 + $0xd8] sm:$0xff] %v2321
        %2441 = vst [vmem:[%s239 + $0xe0] sm:$0xff] %v2324
        %2442 = vst [vmem:[%s239 + $0xe8] sm:$0xff] %v2326
        %2443 = vst [vmem:[%s239 + $0xf0] sm:$0xff] %v2329
        %2444 = vst [vmem:[%s239 + $0xf8] sm:$0xff] %v2331
        %2445 = vst [vmem:[%s239 + $0x100] sm:$0xff] %v2334
        %2446 = vst [vmem:[%s239 + $0x108] sm:$0xff] %v2336
        %2447 = vst [vmem:[%s239 + $0x110] sm:$0xff] %v2339
        %2448 = vst [vmem:[%s239 + $0x118] sm:$0xff] %v2341
        %2449 = vst [vmem:[%s239 + $0x120] sm:$0xff] %v2344
        %2450 = vst [vmem:[%s239 + $0x128] sm:$0xff] %v2346
        %2451 = vst [vmem:[%s239 + $0x130] sm:$0xff] %v2349
        %2452 = vst [vmem:[%s239 + $0x138] sm:$0xff] %v2351
        %2453 = vst [vmem:[%s239 + $0x140] sm:$0xff] %v2354
        %2454 = vst [vmem:[%s239 + $0x148] sm:$0xff] %v2356
        %2455 = vst [vmem:[%s239 + $0x150] sm:$0xff] %v2359
        %2456 = vst [vmem:[%s239 + $0x158] sm:$0xff] %v2361
        %2457 = vst [vmem:[%s239 + $0x160] sm:$0xff] %v2364
        %2458 = vst [vmem:[%s239 + $0x168] sm:$0xff] %v2366
        %2459 = vst [vmem:[%s239 + $0x170] sm:$0xff] %v2369
        %2460 = vst [vmem:[%s239 + $0x178] sm:$0xff] %v2371
        %2461 = vst [vmem:[%s239 + $0x180] sm:$0xff] %v2374
        %2462 = vst [vmem:[%s239 + $0x188] sm:$0xff] %v2376
        %2463 = vst [vmem:[%s239 + $0x190] sm:$0xff] %v2379
        %2464 = vst [vmem:[%s239 + $0x198] sm:$0xff] %v2381
        %2465 = vst [vmem:[%s239 + $0x1a0] sm:$0xff] %v2384
        %2466 = vst [vmem:[%s239 + $0x1a8] sm:$0xff] %v2386
        %2467 = vst [vmem:[%s239 + $0x1b0] sm:$0xff] %v2389
        %2468 = vst [vmem:[%s239 + $0x1b8] sm:$0xff] %v2391
        %2469 = vst [vmem:[%s239 + $0x1c0] sm:$0xff] %v2394
        %2470 = vst [vmem:[%s239 + $0x1c8] sm:$0xff] %v2396
        %2471 = vst [vmem:[%s239 + $0x1d0] sm:$0xff] %v2399
        %2472 = vst [vmem:[%s239 + $0x1d8] sm:$0xff] %v2401
        %2473 = vst [vmem:[%s239 + $0x1e0] sm:$0xff] %v2404
        %2474 = vst [vmem:[%s239 + $0x1e8] sm:$0xff] %v2406
        %2475 = vst [vmem:[%s239 + $0x1f0] sm:$0xff] %v2409
        %2476 = vst [vmem:[%s239 + $0x1f8] sm:$0xff] %v2411
        %s2477 = sand.u32 %s121, 1
        %s2478 = scalar_lea.sflag [#allocation5], %s2477
        %s2479 = sand.u32 %s121, 1
        %s2480 = smul.addr %s2479, 512
        %s2481 = scalar_lea.vmem [#allocation8], %s2480
        // Predicated region
        $region45: #{tpu_custom_call.1} parent=31 // pred_check
          %p2482 = pneg %p131
        $region46: #{tpu_custom_call.1} parent=31 // pred_check_branch
          %2484 = sbr.rel (%p2482) target = $region48
        $region47: #{tpu_custom_call.1} parent=31 // pred_region
          %s2485 = smul.u32 64, %s25
          %2487 = vsyncadd %s2478, 0
          %s2488 = sadd.s32 %s26, %s2485
          %s2489 = smul.addr %s2488, 8
          %s2490 = scalar_lea.hbm %s3, %s2489
          %s2491 = sshll.u32 %s2481, 4
          %s2492 = int_to_ptr.vmem [resolvable:$true] %s2491
          %s2493 = sshll.u32 %s2490, 4
          %s2494 = int_to_ptr.hbm [resolvable:$true] %s2493
          %2499 = dma.vmem_to_hbm [thread:$0]  %s2492, 8192, %s2494, %s2478, 128, 128, 8
        $region48: #{tpu_custom_call.1} parent=31 // pred_fallthru
          _
      $region32: #{tpu_custom_call.1} parent=5 // pred_fallthru
        _
      %p2500 = scmp.le.s32.totalorder 2, %s16
      // Predicated region
      $region49: #{tpu_custom_call.1} parent=5 // pred_check
        %p2501 = pneg %p2500
      $region50: #{tpu_custom_call.1} parent=5 // pred_check_branch
        %2503 = sbr.rel (%p2501) target = $region52
      $region51: #{tpu_custom_call.1} parent=5 // pred_region
        %s2504 = ssub.s32 %s16, 2
        // Predicated region
        $region53: #{tpu_custom_call.1} parent=51 // pred_check
          %p2505 = pneg %p137
        $region54: #{tpu_custom_call.1} parent=51 // pred_check_branch
          %2507 = sbr.rel (%p2505) target = $region56
        $region55: #{tpu_custom_call.1} parent=51 // pred_region
          %s2508 = sand.u32 %s122, 1
          %s2509 = scalar_lea.sflag [#allocation5], %s2508
          %s2510 = sand.u32 %s122, 1
          %s2511 = smul.addr %s2510, 512
          %s2512 = scalar_lea.vmem [#allocation8], %s2511
          %2514 = dma.done %s2509, 8192
        $region56: #{tpu_custom_call.1} parent=51 // pred_fallthru
          _
      $region52: #{tpu_custom_call.1} parent=5 // pred_fallthru
        _
    $region6: #{tpu_custom_call.1} parent=1 // loop_footer
      %s20 = sadd.s32 1, %s16
    $region7: #{tpu_custom_call.1} parent=1 // loop_footer_branch
      %15 = sbr.rel target = $region3
    $region8: #{tpu_custom_call.1} parent=1 // loop_exit
      _
    %2515 = vsyncpa [#allocation4], 1
    %s2516 = scalar_lea.sflag [#allocation4], 1
    %2517 = vsyncpa %s2516, 1
    %2518 = vsyncpa [#allocation7], 1
    %2519 = vsyncpa [#allocation5], 1
    %s2520 = scalar_lea.sflag [#allocation5], 1
    %2521 = vsyncpa %s2520, 1

</llo_original>
